<compile_context>
chip_gen: v6e
topology: v6e:2x2x1
jax: 0.10.0
libtpu: 0.0.40
codegen_flags: <defaults>
</compile_context>

<pallas_src>
import numpy as np
import jax
import jax.numpy as jnp
from jax.experimental import pallas as pl
from jax.experimental.pallas import tpu as pltpu


IN_D = 4              # integrand input dim (x is 1-D, conditioner h is IN_D-1 = 3-D)
HIDDEN = [32, 32]     # hidden_layers
NB_STEPS = 15         # nb_steps; S1 = 16 keeps the node axis a multiple of the sublane tile
BATCH = 16

H1, H2 = HIDDEN
DH = IN_D - 1
S1 = NB_STEPS + 1


def _r8(n):
    return ((n + 7) // 8) * 8


# ---- packed-parameter row layout (all entries start at column 0) -------------
ROW_B1F   = 0                       # (1, 2*H1)  [ib1 | hb1]
ROW_IB2   = 1                       # (1, H2)
ROW_HB2   = 2                       # (1, H2)
ROW_IB3   = 3                       # (1, 1)
ROW_HB3   = 4                       # (1, 2)
ROW_W1X   = 5                       # (1, H1)    integrand layer-1 weight row for the x feature
ROW_W1F   = 8                       # (DH, 2*H1) [w1h | hw1]  (fused layer-1 weight over h)
ROW_NODES = ROW_W1F + _r8(DH)       # (S1, 1)    (steps + 1) / 2     stored as a column
ROW_CCW   = ROW_NODES + _r8(S1)     # (S1, 1)    cc_weights / 2      stored as a column
ROW_IW2   = ROW_CCW + _r8(S1)       # (H1, H2)
ROW_HW2   = ROW_IW2 + _r8(H1)       # (H1, H2)
ROW_IW3   = ROW_HW2 + _r8(H1)       # (H2, 1)
ROW_HW3   = ROW_IW3 + _r8(H2)       # (H2, 2)
N_ROWS    = ROW_HW3 + _r8(H2)       # = 176
N_COLS    = 128                     # lane-aligned so every static slice starts at lane 0


def compute_cc_weights(nb_steps):
    """Clenshaw-Curtis weights/nodes, identical to UMNN ParallelNeuralIntegral."""
    lam = np.arange(0, nb_steps + 1, 1).reshape(-1, 1).astype(np.float64)
    lam = np.cos((lam @ lam.T) * np.pi / nb_steps)
    lam[:, 0] = 0.5
    lam[:, -1] = 0.5 * lam[:, -1]
    lam = lam * 2.0 / nb_steps
    W = np.arange(0, nb_steps + 1, 1).reshape(-1, 1).astype(np.float64)
    W[np.arange(1, nb_steps + 1, 2)] = 0
    W = 2.0 / (1 - W ** 2)
    W[0] = 1
    W[np.arange(1, nb_steps + 1, 2)] = 0
    cc_weights = (lam.T @ W).astype(np.float32).reshape(-1)                      # (S1,)
    steps = np.cos(np.arange(0, nb_steps + 1, 1) * np.pi / nb_steps).astype(np.float32)  # (S1,)
    return cc_weights, steps


def pack_params(params, cc_weights, steps):
    """Pack all weights/biases + folded quadrature constants into one (N_ROWS, 128) array."""
    iw1, ib1, iw2, ib2, iw3, ib3, hw1, hb1, hw2, hb2, hw3, hb3 = [
        np.asarray(p, np.float32) for p in params]
    cc_weights = np.asarray(cc_weights, np.float32)
    steps = np.asarray(steps, np.float32)
    P = np.zeros((N_ROWS, N_COLS), np.float32)
    P[ROW_B1F, 0:2 * H1] = np.concatenate([ib1.reshape(-1), hb1.reshape(-1)])
    P[ROW_IB2, 0:H2] = ib2.reshape(-1)
    P[ROW_HB2, 0:H2] = hb2.reshape(-1)
    P[ROW_IB3, 0:1] = ib3.reshape(-1)
    P[ROW_HB3, 0:2] = hb3.reshape(-1)
    P[ROW_W1X, 0:H1] = iw1[0, :]                                   # x-feature weight row
    P[ROW_W1F:ROW_W1F + DH, 0:2 * H1] = np.concatenate([iw1[1:, :], hw1], axis=1)
    P[ROW_NODES:ROW_NODES + S1, 0] = 0.5 * (steps + 1.0)           # fold (steps+1)/2 on host
    P[ROW_CCW:ROW_CCW + S1, 0] = 0.5 * cc_weights                  # fold (xT-x0)/2 / x = 1/2
    P[ROW_IW2:ROW_IW2 + H1, 0:H2] = iw2
    P[ROW_HW2:ROW_HW2 + H1, 0:H2] = hw2
    P[ROW_IW3:ROW_IW3 + H2, 0:1] = iw3
    P[ROW_HW3:ROW_HW3 + H2, 0:2] = hw3
    return jnp.asarray(P)


def monotonic_kernel(x_ref, h_ref, p_ref, o_ref):
    x = x_ref[...]                                        # (TB, 1)
    h = h_ref[...]                                        # (TB, DH)
    tb = x.shape[0]

    # ---- fused layer 1 (integrand h-part | conditioner): one MXU dot over h ----
    w1f = p_ref[ROW_W1F:ROW_W1F + DH, 0:2 * H1]           # (DH, 2*H1) = [w1h | hw1]
    b1f = p_ref[ROW_B1F:ROW_B1F + 1, 0:2 * H1]            # (1, 2*H1)  = [ib1 | hb1]
    z1f = jnp.dot(h, w1f, preferred_element_type=jnp.float32) + b1f   # (TB, 2*H1)
    zh = z1f[:, 0:H1]                                     # integrand pre-act, h contribution
    u = jnp.maximum(z1f[:, H1:2 * H1], 0.0)               # conditioner layer-1 activation

    # ---- integrand at all quadrature nodes (node axis lives on sublanes) -------
    nodes = p_ref[ROW_NODES:ROW_NODES + S1, 0:1]          # (S1, 1)  = (steps + 1)/2
    w1x = p_ref[ROW_W1X:ROW_W1X + 1, 0:H1]                # (1, H1)
    xw = x * w1x                                          # (TB, H1)  x ⊗ w1x outer product
    z = zh[:, None, :] + nodes[None, :, :] * xw[:, None, :]   # (TB, S1, H1)
    z = jnp.maximum(z, 0.0)
    z = z.reshape(tb * S1, H1)                            # layout-preserving (S1 % 8 == 0)

    iw2 = p_ref[ROW_IW2:ROW_IW2 + H1, 0:H2]               # (H1, H2)
    ib2 = p_ref[ROW_IB2:ROW_IB2 + 1, 0:H2]                # (1, H2)
    z = jnp.maximum(jnp.dot(z, iw2, preferred_element_type=jnp.float32) + ib2, 0.0)

    iw3 = p_ref[ROW_IW3:ROW_IW3 + H2, 0:1]                # (H2, 1)
    ib3 = p_ref[ROW_IB3:ROW_IB3 + 1, 0:1]                 # (1, 1) — broadcast, no scalar extract
    z = jnp.dot(z, iw3, preferred_element_type=jnp.float32) + ib3     # (TB*S1, 1)
    z = jnp.where(z > 0.0, z, jnp.exp(z) - 1.0) + 1.0     # ELU, then +1.0 (IntegrandNN)

    # ---- Clenshaw-Curtis weighted sum; the 1/2 factor is folded into ccw -------
    ccw = p_ref[ROW_CCW:ROW_CCW + S1, 0:1]                # (S1, 1)
    z = z.reshape(tb, S1, 1)                              # layout-preserving
    integral = jnp.sum(z * ccw[None, :, :], axis=1) * x   # (TB, 1)

    # ---- conditioner layers 2-3 -------------------------------------------------
    hw2 = p_ref[ROW_HW2:ROW_HW2 + H1, 0:H2]
    hb2 = p_ref[ROW_HB2:ROW_HB2 + 1, 0:H2]
    u = jnp.maximum(jnp.dot(u, hw2, preferred_element_type=jnp.float32) + hb2, 0.0)
    hw3 = p_ref[ROW_HW3:ROW_HW3 + H2, 0:2]
    hb3 = p_ref[ROW_HB3:ROW_HB3 + 1, 0:2]
    u = jnp.dot(u, hw3, preferred_element_type=jnp.float32) + hb3     # (TB, 2)

    offset = u[:, 0:1]
    scaling = jnp.exp(u[:, 1:2])
    # TODO(synk): at large batch, emit a lane-dense (1, TB) output and reshape in
    # the wrapper to avoid masked partial stores on a last-dim-1 output.
    o_ref[...] = scaling * integral + offset


def monotonic_nn(x, h, packed, *, tb=None):
    B = x.shape[0]
    dh = h.shape[1]
    if tb is None:
        tb = B                       # single grid step at small batch sizes
    # For large batches pick tb as the largest multiple of 8 that fits VMEM
    # (budget the padded (tb*S1, H) f32 intermediates; 64 MiB on v7x), and keep
    # >= 2 grid tiles on v7x so both TensorCores get work.
    assert B % tb == 0 and (tb == B or tb % 8 == 0)
    grid = (B // tb,)
    return pl.pallas_call(
        monotonic_kernel,
        out_shape=jax.ShapeDtypeStruct((B, 1), jnp.float32),
        grid_spec=pltpu.PrefetchScalarGridSpec(
            num_scalar_prefetch=0,
            grid=grid,
            in_specs=[
                pl.BlockSpec((tb, 1), lambda i: (i, 0)),
                pl.BlockSpec((tb, dh), lambda i: (i, 0)),
                pl.BlockSpec((N_ROWS, N_COLS), lambda i: (0, 0)),
            ],
            out_specs=pl.BlockSpec((tb, 1), lambda i: (i, 0)),
        ),
        compiler_params=pltpu.CompilerParams(dimension_semantics=("parallel",)),
    )(x, h, packed)


def reference(x, h, params, cc_weights, steps):
    """Pure-JAX replica of MonotonicNN.forward for verification."""
    iw1, ib1, iw2, ib2, iw3, ib3, hw1, hb1, hw2, hb2, hw3, hb3 = params
    B = x.shape[0]
    s1 = steps.shape[0]
    X = x * (steps[None, :] + 1.0) / 2.0                                  # (B, S1)
    hb = jnp.broadcast_to(h[:, None, :], (B, s1, h.shape[1]))
    inp = jnp.concatenate([X[:, :, None], hb], axis=2).reshape(B * s1, -1)
    z = jax.nn.relu(inp @ iw1 + ib1)
    z = jax.nn.relu(z @ iw2 + ib2)
    z = z @ iw3 + ib3
    z = jnp.where(z > 0, z, jnp.exp(z) - 1.0) + 1.0
    z = z.reshape(B, s1)
    z_est = (z * cc_weights[None, :]).sum(axis=1, keepdims=True)
    integral = z_est * x / 2.0
    u = jax.nn.relu(h @ hw1 + hb1)
    u = jax.nn.relu(u @ hw2 + hb2)
    u = u @ hw3 + hb3
    return jnp.exp(u[:, 1:2]) * integral + u[:, 0:1]


if __name__ == "__main__":
    key = jax.random.PRNGKey(0)
    ks = jax.random.split(key, 8)

    def lin(k, fan_in, fan_out):
        kw, kb = jax.random.split(k)
        lim = 1.0 / np.sqrt(fan_in)
        W = jax.random.uniform(kw, (fan_in, fan_out), jnp.float32, -lim, lim)
        b = jax.random.uniform(kb, (1, fan_out), jnp.float32, -lim, lim)
        return W, b

    iw1, ib1 = lin(ks[0], IN_D, H1)   # IntegrandNN
    iw2, ib2 = lin(ks[1], H1, H2)
    iw3, ib3 = lin(ks[2], H2, 1)
    hw1, hb1 = lin(ks[3], DH, H1)     # conditioner net on h
    hw2, hb2 = lin(ks[4], H1, H2)
    hw3, hb3 = lin(ks[5], H2, 2)
    params = (iw1, ib1, iw2, ib2, iw3, ib3, hw1, hb1, hw2, hb2, hw3, hb3)

    x = jax.random.normal(ks[6], (BATCH, 1), jnp.float32)
    h = jax.random.normal(ks[7], (BATCH, DH), jnp.float32)

    ccw_np, steps_np = compute_cc_weights(NB_STEPS)
    cc_weights = jnp.asarray(ccw_np)
    steps = jnp.asarray(steps_np)
    packed = pack_params(params, ccw_np, steps_np)

    out = monotonic_nn(x, h, packed)
    out = jax.block_until_ready(out)

    ref = reference(x, h, params, cc_weights, steps)
    np.testing.assert_allclose(np.asarray(out), np.asarray(ref), rtol=1e-5, atol=1e-5)
    print("KERNEL_OK")
</pallas_src>

<mosaic_0001>
module attributes {stable_mosaic.version = 11 : i64} {
  func.func @monotonic_kernel(%arg0: i32, %arg1: memref<16x1xf32, #tpu.memory_space<vmem>>, %arg2: memref<16x3xf32, #tpu.memory_space<vmem>>, %arg3: memref<176x128xf32, #tpu.memory_space<vmem>>, %arg4: memref<16x1xf32, #tpu.memory_space<vmem>>) attributes {dimension_semantics = [#tpu.dimension_semantics<parallel>], iteration_bounds = array<i64: 1>, scalar_prefetch = 0 : i64, scratch_operands = 0 : i64, tpu.core_type = #tpu.core_type<tc>, window_params = [{transform_indices = @transform_0, window_bounds = array<i64: 16, 1>}, {transform_indices = @transform_1, window_bounds = array<i64: 16, 3>}, {pipeline_mode = #tpu.pipeline_mode<synchronous>, transform_indices = @transform_2, window_bounds = array<i64: 176, 128>}, {transform_indices = @transform_3, window_bounds = array<i64: 16, 1>}]} {
    %c0 = arith.constant 0 : index
    %c0_0 = arith.constant 0 : index
    %0 = vector.load %arg1[%c0, %c0_0] : memref<16x1xf32, #tpu.memory_space<vmem>>, vector<16x1xf32>
    %c0_1 = arith.constant 0 : index
    %c0_2 = arith.constant 0 : index
    %1 = vector.load %arg2[%c0_1, %c0_2] : memref<16x3xf32, #tpu.memory_space<vmem>>, vector<16x3xf32>
    %c8 = arith.constant 8 : index
    %c0_3 = arith.constant 0 : index
    %2 = vector.load %arg3[%c8, %c0_3] : memref<176x128xf32, #tpu.memory_space<vmem>>, vector<3x64xf32>
    %c0_4 = arith.constant 0 : index
    %c0_5 = arith.constant 0 : index
    %3 = vector.load %arg3[%c0_4, %c0_5] : memref<176x128xf32, #tpu.memory_space<vmem>>, vector<1x64xf32>
    %cst = arith.constant dense<0.000000e+00> : vector<16x64xf32>
    %4 = tpu.matmul %1, %2, %cst {dimension_numbers = #tpu.dot_dimension_numbers<[1], [0], [0], [1], [0, 0, 1, 1], [], []>} : vector<16x3xf32>, vector<3x64xf32>, vector<16x64xf32> -> vector<16x64xf32>
    %5 = vector.broadcast %3 : vector<1x64xf32> to vector<16x64xf32>
    %6 = arith.addf %4, %5 : vector<16x64xf32>
    %7 = vector.extract_strided_slice %6 {offsets = [0, 0], sizes = [16, 32], strides = [1, 1]} : vector<16x64xf32> to vector<16x32xf32>
    %8 = vector.extract_strided_slice %6 {offsets = [0, 32], sizes = [16, 32], strides = [1, 1]} : vector<16x64xf32> to vector<16x32xf32>
    %cst_6 = arith.constant 0.000000e+00 : f32
    %9 = vector.broadcast %cst_6 : f32 to vector<16x32xf32>
    %10 = arith.maximumf %8, %9 : vector<16x32xf32>
    %c16 = arith.constant 16 : index
    %c0_7 = arith.constant 0 : index
    %11 = vector.load %arg3[%c16, %c0_7] : memref<176x128xf32, #tpu.memory_space<vmem>>, vector<16x1xf32>
    %c5 = arith.constant 5 : index
    %c0_8 = arith.constant 0 : index
    %12 = vector.load %arg3[%c5, %c0_8] : memref<176x128xf32, #tpu.memory_space<vmem>>, vector<1x32xf32>
    %13 = vector.broadcast %0 : vector<16x1xf32> to vector<16x32xf32>
    %14 = vector.broadcast %12 : vector<1x32xf32> to vector<16x32xf32>
    %15 = arith.mulf %13, %14 : vector<16x32xf32>
    %16 = vector.shape_cast %7 : vector<16x32xf32> to vector<16x1x32xf32>
    %17 = vector.shape_cast %11 : vector<16x1xf32> to vector<1x16x1xf32>
    %18 = vector.shape_cast %15 : vector<16x32xf32> to vector<16x1x32xf32>
    %19 = vector.broadcast %17 : vector<1x16x1xf32> to vector<16x16x32xf32>
    %20 = vector.broadcast %18 : vector<16x1x32xf32> to vector<16x16x32xf32>
    %21 = arith.mulf %19, %20 : vector<16x16x32xf32>
    %22 = vector.broadcast %16 : vector<16x1x32xf32> to vector<16x16x32xf32>
    %23 = arith.addf %22, %21 : vector<16x16x32xf32>
    %cst_9 = arith.constant 0.000000e+00 : f32
    %24 = vector.broadcast %cst_9 : f32 to vector<16x16x32xf32>
    %25 = arith.maximumf %23, %24 : vector<16x16x32xf32>
    %26 = vector.shape_cast %25 : vector<16x16x32xf32> to vector<256x32xf32>
    %c48 = arith.constant 48 : index
    %c0_10 = arith.constant 0 : index
    %27 = vector.load %arg3[%c48, %c0_10] : memref<176x128xf32, #tpu.memory_space<vmem>>, vector<32x32xf32>
    %c1 = arith.constant 1 : index
    %c0_11 = arith.constant 0 : index
    %28 = vector.load %arg3[%c1, %c0_11] : memref<176x128xf32, #tpu.memory_space<vmem>>, vector<1x32xf32>
    %cst_12 = arith.constant dense<0.000000e+00> : vector<256x32xf32>
    %29 = tpu.matmul %26, %27, %cst_12 {dimension_numbers = #tpu.dot_dimension_numbers<[1], [0], [0], [1], [0, 0, 1, 1], [], []>} : vector<256x32xf32>, vector<32x32xf32>, vector<256x32xf32> -> vector<256x32xf32>
    %30 = vector.broadcast %28 : vector<1x32xf32> to vector<256x32xf32>
    %31 = arith.addf %29, %30 : vector<256x32xf32>
    %cst_13 = arith.constant 0.000000e+00 : f32
    %32 = vector.broadcast %cst_13 : f32 to vector<256x32xf32>
    %33 = arith.maximumf %31, %32 : vector<256x32xf32>
    %c112 = arith.constant 112 : index
    %c0_14 = arith.constant 0 : index
    %34 = vector.load %arg3[%c112, %c0_14] : memref<176x128xf32, #tpu.memory_space<vmem>>, vector<32x1xf32>
    %c3 = arith.constant 3 : index
    %c0_15 = arith.constant 0 : index
    %35 = vector.load %arg3[%c3, %c0_15] : memref<176x128xf32, #tpu.memory_space<vmem>>, vector<1x1xf32>
    %cst_16 = arith.constant dense<0.000000e+00> : vector<256x1xf32>
    %36 = tpu.matmul %33, %34, %cst_16 {dimension_numbers = #tpu.dot_dimension_numbers<[1], [0], [0], [1], [0, 0, 1, 1], [], []>} : vector<256x32xf32>, vector<32x1xf32>, vector<256x1xf32> -> vector<256x1xf32>
    %37 = vector.broadcast %35 : vector<1x1xf32> to vector<256x1xf32>
    %38 = arith.addf %36, %37 : vector<256x1xf32>
    %cst_17 = arith.constant 0.000000e+00 : f32
    %39 = vector.broadcast %cst_17 : f32 to vector<256x1xf32>
    %40 = arith.cmpf ogt, %38, %39 : vector<256x1xf32>
    %41 = math.exp %38 : vector<256x1xf32>
    %cst_18 = arith.constant 1.000000e+00 : f32
    %42 = vector.broadcast %cst_18 : f32 to vector<256x1xf32>
    %43 = arith.subf %41, %42 : vector<256x1xf32>
    %44 = arith.select %40, %38, %43 : vector<256x1xi1>, vector<256x1xf32>
    %cst_19 = arith.constant 1.000000e+00 : f32
    %45 = vector.broadcast %cst_19 : f32 to vector<256x1xf32>
    %46 = arith.addf %44, %45 : vector<256x1xf32>
    %c32 = arith.constant 32 : index
    %c0_20 = arith.constant 0 : index
    %47 = vector.load %arg3[%c32, %c0_20] : memref<176x128xf32, #tpu.memory_space<vmem>>, vector<16x1xf32>
    %48 = vector.shape_cast %46 : vector<256x1xf32> to vector<16x16x1xf32>
    %49 = vector.shape_cast %47 : vector<16x1xf32> to vector<1x16x1xf32>
    %50 = vector.broadcast %49 : vector<1x16x1xf32> to vector<16x16x1xf32>
    %51 = arith.mulf %48, %50 : vector<16x16x1xf32>
    %cst_21 = arith.constant dense<0.000000e+00> : vector<16x1xf32>
    %52 = vector.multi_reduction <add>, %51, %cst_21 [1] : vector<16x16x1xf32> to vector<16x1xf32>
    %53 = arith.mulf %52, %0 : vector<16x1xf32>
    %c80 = arith.constant 80 : index
    %c0_22 = arith.constant 0 : index
    %54 = vector.load %arg3[%c80, %c0_22] : memref<176x128xf32, #tpu.memory_space<vmem>>, vector<32x32xf32>
    %c2 = arith.constant 2 : index
    %c0_23 = arith.constant 0 : index
    %55 = vector.load %arg3[%c2, %c0_23] : memref<176x128xf32, #tpu.memory_space<vmem>>, vector<1x32xf32>
    %cst_24 = arith.constant dense<0.000000e+00> : vector<16x32xf32>
    %56 = tpu.matmul %10, %54, %cst_24 {dimension_numbers = #tpu.dot_dimension_numbers<[1], [0], [0], [1], [0, 0, 1, 1], [], []>} : vector<16x32xf32>, vector<32x32xf32>, vector<16x32xf32> -> vector<16x32xf32>
    %57 = vector.broadcast %55 : vector<1x32xf32> to vector<16x32xf32>
    %58 = arith.addf %56, %57 : vector<16x32xf32>
    %cst_25 = arith.constant 0.000000e+00 : f32
    %59 = vector.broadcast %cst_25 : f32 to vector<16x32xf32>
    %60 = arith.maximumf %58, %59 : vector<16x32xf32>
    %c144 = arith.constant 144 : index
    %c0_26 = arith.constant 0 : index
    %61 = vector.load %arg3[%c144, %c0_26] : memref<176x128xf32, #tpu.memory_space<vmem>>, vector<32x2xf32>
    %c4 = arith.constant 4 : index
    %c0_27 = arith.constant 0 : index
    %62 = vector.load %arg3[%c4, %c0_27] : memref<176x128xf32, #tpu.memory_space<vmem>>, vector<1x2xf32>
    %cst_28 = arith.constant dense<0.000000e+00> : vector<16x2xf32>
    %63 = tpu.matmul %60, %61, %cst_28 {dimension_numbers = #tpu.dot_dimension_numbers<[1], [0], [0], [1], [0, 0, 1, 1], [], []>} : vector<16x32xf32>, vector<32x2xf32>, vector<16x2xf32> -> vector<16x2xf32>
    %64 = vector.broadcast %62 : vector<1x2xf32> to vector<16x2xf32>
    %65 = arith.addf %63, %64 : vector<16x2xf32>
    %66 = vector.extract_strided_slice %65 {offsets = [0, 0], sizes = [16, 1], strides = [1, 1]} : vector<16x2xf32> to vector<16x1xf32>
    %67 = vector.extract_strided_slice %65 {offsets = [0, 1], sizes = [16, 1], strides = [1, 1]} : vector<16x2xf32> to vector<16x1xf32>
    %68 = math.exp %67 : vector<16x1xf32>
    %69 = arith.mulf %68, %53 : vector<16x1xf32>
    %70 = arith.addf %69, %66 : vector<16x1xf32>
    %c0_29 = arith.constant 0 : index
    %c0_30 = arith.constant 0 : index
    %71 = vector.load %arg4[%c0_29, %c0_30] : memref<16x1xf32, #tpu.memory_space<vmem>>, vector<16x1xf32>
    tpu.vector_store %arg4[%c0_29, %c0_30], %70 {strides = array<i32>} : memref<16x1xf32, #tpu.memory_space<vmem>>, vector<16x1xf32>,
    return
  }
  func.func @transform_0(%arg0: i32) -> (i32, i32) {
    %c0_i32 = arith.constant 0 : i32
    %c0_i32_0 = arith.constant 0 : i32
    return %arg0, %c0_i32 : i32, i32
  }
  func.func @transform_1(%arg0: i32) -> (i32, i32) {
    %c0_i32 = arith.constant 0 : i32
    %c0_i32_0 = arith.constant 0 : i32
    return %arg0, %c0_i32 : i32, i32
  }
  func.func @transform_2(%arg0: i32) -> (i32, i32) {
    %c0_i32 = arith.constant 0 : i32
    %c0_i32_0 = arith.constant 0 : i32
    %c0_i32_1 = arith.constant 0 : i32
    return %c0_i32, %c0_i32_0 : i32, i32
  }
  func.func @transform_3(%arg0: i32) -> (i32, i32) {
    %c0_i32 = arith.constant 0 : i32
    %c0_i32_0 = arith.constant 0 : i32
    return %arg0, %c0_i32 : i32, i32
  }
}

</mosaic_0001>

<llo_original>
// kernel: tpu_custom_call.1
$region0: #{tpu_custom_call.1}
  #allocation0 [shape = 'u32[]', space=smem, size = 0x4, offset = 0x4, fixed_abs, tag = 'smem constant byte address 0x4 - core index']
  #allocation1 [shape = 'u32[144,128]{1,0:T(1,128)}', space=vmem, size = 0x12000, scoped, tag = 'internal scratch']
  %s0 = inlined_call_operand.vmem [shape: f32[16,1], index: 0, kind: input, shape index: {}]
  %s1 = inlined_call_operand.vmem [shape: f32[16,3], index: 1, kind: input, shape index: {}]
  %s2 = inlined_call_operand.hbm [shape: f32[176,128], index: 2, kind: input, shape index: {}]
  %s3 = inlined_call_operand.vmem [shape: f32[16,1], index: 3, kind: output, shape index: {}]
  %s4 = sld [smem:[#allocation0]]
  $region26: #{tpu_custom_call.1} parent=0
    _
  %s6 = ssub.s32 1, %s4
  %s7 = scalar_select 0, %s6, %s4
  $region1: #{tpu_custom_call.1} parent=0
    #allocation2 [shape = 'u8[90112]{0}', space=vmem, size = 0x16000, scoped, tag = 'input window, operand 2, single buffered']
    #allocation3 [shape = 's32[1]{0}', space=sflag, size = 0x4, scoped, tag = 'scoped memory for tpu_custom_call.1']
    %8 = vsyncpa [#allocation3], 0
    // Predicated region
    $region2: #{tpu_custom_call.1} parent=1 // pred_check
      _
    $region3: #{tpu_custom_call.1} parent=1 // pred_check_branch
      %10 = sbr.rel (0) target = $region5
    $region4: #{tpu_custom_call.1} parent=1 // pred_region
      _
    $region5: #{tpu_custom_call.1} parent=1 // pred_fallthru
      _
    // Predicated region
    $region6: #{tpu_custom_call.1} parent=1 // pred_check
      _
    $region7: #{tpu_custom_call.1} parent=1 // pred_check_branch
      %12 = sbr.rel (0) target = $region9
    $region8: #{tpu_custom_call.1} parent=1 // pred_region
      _
    $region9: #{tpu_custom_call.1} parent=1 // pred_fallthru
      _
    // Predicated region
    $region10: #{tpu_custom_call.1} parent=1 // pred_check
      _
    $region11: #{tpu_custom_call.1} parent=1 // pred_check_branch
      %14 = sbr.rel (0) target = $region13
    $region12: #{tpu_custom_call.1} parent=1 // pred_region
      %s16 = ssub.s32 2816, 2816
      %17 = vsyncadd [#allocation3], %s16
      %s18 = sshll.u32 [#allocation2], 4
      %s19 = int_to_ptr.vmem [resolvable:$true] %s18
      %24 = dma.hbm_to_vmem [thread:$0]  %s2, 2816, %s19, [#allocation3], 128, 128, 8
    $region13: #{tpu_custom_call.1} parent=1 // pred_fallthru
      _
    // Predicated region
    $region14: #{tpu_custom_call.1} parent=1 // pred_check
      _
    $region15: #{tpu_custom_call.1} parent=1 // pred_check_branch
      %26 = sbr.rel (0) target = $region17
    $region16: #{tpu_custom_call.1} parent=1 // pred_region
      %27 = dma.done [#allocation3], 2816
    $region17: #{tpu_custom_call.1} parent=1 // pred_fallthru
      _
    %v28 = vld [vmem:[%s0] sm:$0xff]
    %v29 = vld [vmem:[%s0 + $0x8] sm:$0xff]
    %v30 = vld [vmem:[%s1] sm:$0xff]
    %v31 = vld [vmem:[%s1 + $0x8] sm:$0xff]
    %v32 = vld [vmem:[#allocation2 + $0x8] sm:$0x7]
    %v33 = vld [vmem:[#allocation2] sm:$0x1]
    %v34 = vlaneseq
    %v35 = vshrl.u32 %v34, 7
    %v36 = vsub.s32 0, %v35
    %v37 = vrot.slane %v33, %v36
    %vm38 = vcmask 23552
    %v40 = vsel %vm38, %v30, 0
    %v43 = vsel %vm38, %v31, 0
    %vm45 = vcmask 1042432
    %v47 = vsel %vm45, %v32, 0
    %49 = vmatprep.subr.mxu0 0.0
    %50 = vmatpush1.msra.mxu0 0.0
    %51 = vmatprep.subr.mxu0 0.0
    %52 = vmatpush1.msra.mxu0 0.0
    %53 = vmatprep.subr.mxu0 0.0
    %54 = vmatpush1.msra.mxu0 0.0
    %55 = vmatprep.subr.mxu0 0.0
    %56 = vmatpush1.msra.mxu0 0.0
    %57 = vmatprep.subr.mxu0 0.0
    %58 = vmatpush1.msra.mxu0 0.0
    %59 = vmatprep.subr.mxu0 0.0
    %60 = vmatpush1.msra.mxu0 0.0
    %61 = vmatprep.subr.mxu0 0.0
    %62 = vmatpush1.msra.mxu0 0.0
    %63 = vmatprep.subr.mxu0 0.0
    %64 = vmatpush1.msra.mxu0 0.0
    %65 = vmatprep.subr.mxu0 0.0
    %66 = vmatpush1.msra.mxu0 0.0
    %67 = vmatprep.subr.mxu0 0.0
    %68 = vmatpush1.msra.mxu0 0.0
    %69 = vmatprep.subr.mxu0 0.0
    %70 = vmatpush1.msra.mxu0 0.0
    %71 = vmatprep.subr.mxu0 0.0
    %72 = vmatpush1.msra.mxu0 0.0
    %73 = vmatprep.subr.mxu0 0.0
    %74 = vmatpush1.msra.mxu0 0.0
    %75 = vmatprep.subr.mxu0 0.0
    %76 = vmatpush1.msra.mxu0 0.0
    %77 = vmatprep.subr.mxu0 0.0
    %78 = vmatpush1.msra.mxu0 0.0
    %79 = vmatprep.subr.mxu0 0.0
    %80 = vmatpush1.msra.mxu0 %v47
    %81 = vmatprep.subr.mxu0 0.0
    %82 = vmatpush2.msra.mxu0 0.0
    %83 = vmatprep.subr.mxu0 0.0
    %84 = vmatpush2.msra.mxu0 0.0
    %85 = vmatprep.subr.mxu0 0.0
    %86 = vmatpush2.msra.mxu0 0.0
    %87 = vmatprep.subr.mxu0 0.0
    %88 = vmatpush2.msra.mxu0 0.0
    %89 = vmatprep.subr.mxu0 0.0
    %90 = vmatpush2.msra.mxu0 0.0
    %91 = vmatprep.subr.mxu0 0.0
    %92 = vmatpush2.msra.mxu0 0.0
    %93 = vmatprep.subr.mxu0 0.0
    %94 = vmatpush2.msra.mxu0 0.0
    %95 = vmatprep.subr.mxu0 0.0
    %96 = vmatpush2.msra.mxu0 0.0
    %97 = vmatprep.subr.mxu0 0.0
    %98 = vmatpush2.msra.mxu0 0.0
    %99 = vmatprep.subr.mxu0 0.0
    %100 = vmatpush2.msra.mxu0 0.0
    %101 = vmatprep.subr.mxu0 0.0
    %102 = vmatpush2.msra.mxu0 0.0
    %103 = vmatprep.subr.mxu0 0.0
    %104 = vmatpush2.msra.mxu0 0.0
    %105 = vmatprep.subr.mxu0 0.0
    %106 = vmatpush2.msra.mxu0 0.0
    %107 = vmatprep.subr.mxu0 0.0
    %108 = vmatpush2.msra.mxu0 0.0
    %109 = vmatprep.subr.mxu0 0.0
    %110 = vmatpush2.msra.mxu0 0.0
    %111 = vmatprep.subr.mxu0 0.0
    %112 = vmatpush2.msra.mxu0 0.0
    %113 = vmatprep.mubr.f32.mxu0 0.0
    %114 = vmatmul.mubr.f32.gmra.mxu0 %v40
    %v115 = vpop.f32.mrf.mxu0
    %v116 = vadd.f32 %v37, %v115
    %v117 = vpop.f32.mrf.mxu0
    %118 = vmatprep.mubr.f32.mxu0 0.0
    %119 = vmatmul.mubr.f32.gmra.mxu0 %v43
    %v120 = vpop.f32.mrf.mxu0
    %v121 = vadd.f32 %v37, %v120
    %v122 = vpop.f32.mrf.mxu0
    %123 = vdwg.mxu0
    %v124 = vmax.f32 %v116, 0.0
    %v125 = vmax.f32 %v121, 0.0
    %v126 = vld [vmem:[#allocation2 + $0x10] sm:$0xff]
    %v127 = vld [vmem:[#allocation2 + $0x18] sm:$0xff]
    %v128 = vld [vmem:[#allocation2 + $0x5] sm:$0x1]
    %130 = vset.pattern.permute.xlu0 0
    %131 = vperm.xlu0 %130, %v28
    %v132 = vpop.permute.xlu0 %131
    %135 = vset.pattern.permute.xlu0 0
    %136 = vperm.xlu0 %135, %v29
    %v137 = vpop.permute.xlu0 %136
    %v139 = vlaneseq
    %v140 = vshrl.u32 %v139, 7
    %v141 = vsub.s32 0, %v140
    %v142 = vrot.slane %v128, %v141
    %v143 = vmul.f32 %v132, %v142
    %v144 = vmul.f32 %v137, %v142
    %v147 = vcombine.high %v116, %v116
    %v149 = vunpack.c.l.s4 1966171168
    %v150 = vunpack.c.0.s8 %v149
    %v151 = vlaneseq
    %v152 = vshrl.u32 %v151, 7
    %v153 = vsub.s32 %v150, %v152
    %v154 = vrot.slane %v116, %v153
    %v156 = vunpack.c.l.s4 1966171168
    %v157 = vunpack.c.0.s8 %v156
    %v158 = vlaneseq
    %v159 = vshrl.u32 %v158, 7
    %v160 = vsub.s32 %v157, %v159
    %v161 = vrot.slane %v147, %v160
    %v162 = vcombine.high %v154, %v154
    %v163 = vcombine.high %v161, %v161
    %v165 = vunpack.c.l.s4 1966171168
    %v166 = vunpack.c.0.s8 %v165
    %v167 = vlaneseq
    %v168 = vshrl.u32 %v167, 7
    %v169 = vsub.s32 %v166, %v168
    %v170 = vrot.slane %v154, %v169
    %v172 = vunpack.c.l.s4 1966171168
    %v173 = vunpack.c.0.s8 %v172
    %v174 = vlaneseq
    %v175 = vshrl.u32 %v174, 7
    %v176 = vsub.s32 %v173, %v175
    %v177 = vrot.slane %v161, %v176
    %v179 = vunpack.c.l.s4 1966171168
    %v180 = vunpack.c.0.s8 %v179
    %v181 = vlaneseq
    %v182 = vshrl.u32 %v181, 7
    %v183 = vsub.s32 %v180, %v182
    %v184 = vrot.slane %v162, %v183
    %v186 = vunpack.c.l.s4 1966171168
    %v187 = vunpack.c.0.s8 %v186
    %v188 = vlaneseq
    %v189 = vshrl.u32 %v188, 7
    %v190 = vsub.s32 %v187, %v189
    %v191 = vrot.slane %v163, %v190
    %v192 = vcombine.high %v170, %v170
    %v193 = vcombine.high %v177, %v177
    %v194 = vcombine.high %v184, %v184
    %v195 = vcombine.high %v191, %v191
    %v196 = vcombine.high %v121, %v121
    %v198 = vunpack.c.l.s4 1966171168
    %v199 = vunpack.c.0.s8 %v198
    %v200 = vlaneseq
    %v201 = vshrl.u32 %v200, 7
    %v202 = vsub.s32 %v199, %v201
    %v203 = vrot.slane %v121, %v202
    %v205 = vunpack.c.l.s4 1966171168
    %v206 = vunpack.c.0.s8 %v205
    %v207 = vlaneseq
    %v208 = vshrl.u32 %v207, 7
    %v209 = vsub.s32 %v206, %v208
    %v210 = vrot.slane %v196, %v209
    %v211 = vcombine.high %v203, %v203
    %v212 = vcombine.high %v210, %v210
    %v214 = vunpack.c.l.s4 1966171168
    %v215 = vunpack.c.0.s8 %v214
    %v216 = vlaneseq
    %v217 = vshrl.u32 %v216, 7
    %v218 = vsub.s32 %v215, %v217
    %v219 = vrot.slane %v203, %v218
    %v221 = vunpack.c.l.s4 1966171168
    %v222 = vunpack.c.0.s8 %v221
    %v223 = vlaneseq
    %v224 = vshrl.u32 %v223, 7
    %v225 = vsub.s32 %v222, %v224
    %v226 = vrot.slane %v210, %v225
    %v228 = vunpack.c.l.s4 1966171168
    %v229 = vunpack.c.0.s8 %v228
    %v230 = vlaneseq
    %v231 = vshrl.u32 %v230, 7
    %v232 = vsub.s32 %v229, %v231
    %v233 = vrot.slane %v211, %v232
    %v235 = vunpack.c.l.s4 1966171168
    %v236 = vunpack.c.0.s8 %v235
    %v237 = vlaneseq
    %v238 = vshrl.u32 %v237, 7
    %v239 = vsub.s32 %v236, %v238
    %v240 = vrot.slane %v212, %v239
    %v241 = vcombine.high %v219, %v219
    %v242 = vcombine.high %v226, %v226
    %v243 = vcombine.high %v233, %v233
    %v244 = vcombine.high %v240, %v240
    %v247 = vcombine.high %v143, %v143
    %v249 = vunpack.c.l.s4 1966171168
    %v250 = vunpack.c.0.s8 %v249
    %v251 = vlaneseq
    %v252 = vshrl.u32 %v251, 7
    %v253 = vsub.s32 %v250, %v252
    %v254 = vrot.slane %v143, %v253
    %v256 = vunpack.c.l.s4 1966171168
    %v257 = vunpack.c.0.s8 %v256
    %v258 = vlaneseq
    %v259 = vshrl.u32 %v258, 7
    %v260 = vsub.s32 %v257, %v259
    %v261 = vrot.slane %v247, %v260
    %v262 = vcombine.high %v254, %v254
    %v263 = vcombine.high %v261, %v261
    %v265 = vunpack.c.l.s4 1966171168
    %v266 = vunpack.c.0.s8 %v265
    %v267 = vlaneseq
    %v268 = vshrl.u32 %v267, 7
    %v269 = vsub.s32 %v266, %v268
    %v270 = vrot.slane %v254, %v269
    %v272 = vunpack.c.l.s4 1966171168
    %v273 = vunpack.c.0.s8 %v272
    %v274 = vlaneseq
    %v275 = vshrl.u32 %v274, 7
    %v276 = vsub.s32 %v273, %v275
    %v277 = vrot.slane %v261, %v276
    %v279 = vunpack.c.l.s4 1966171168
    %v280 = vunpack.c.0.s8 %v279
    %v281 = vlaneseq
    %v282 = vshrl.u32 %v281, 7
    %v283 = vsub.s32 %v280, %v282
    %v284 = vrot.slane %v262, %v283
    %v286 = vunpack.c.l.s4 1966171168
    %v287 = vunpack.c.0.s8 %v286
    %v288 = vlaneseq
    %v289 = vshrl.u32 %v288, 7
    %v290 = vsub.s32 %v287, %v289
    %v291 = vrot.slane %v263, %v290
    %v292 = vcombine.high %v270, %v270
    %v293 = vcombine.high %v277, %v277
    %v294 = vcombine.high %v284, %v284
    %v295 = vcombine.high %v291, %v291
    %v296 = vcombine.high %v144, %v144
    %v298 = vunpack.c.l.s4 1966171168
    %v299 = vunpack.c.0.s8 %v298
    %v300 = vlaneseq
    %v301 = vshrl.u32 %v300, 7
    %v302 = vsub.s32 %v299, %v301
    %v303 = vrot.slane %v144, %v302
    %v305 = vunpack.c.l.s4 1966171168
    %v306 = vunpack.c.0.s8 %v305
    %v307 = vlaneseq
    %v308 = vshrl.u32 %v307, 7
    %v309 = vsub.s32 %v306, %v308
    %v310 = vrot.slane %v296, %v309
    %v311 = vcombine.high %v303, %v303
    %v312 = vcombine.high %v310, %v310
    %v314 = vunpack.c.l.s4 1966171168
    %v315 = vunpack.c.0.s8 %v314
    %v316 = vlaneseq
    %v317 = vshrl.u32 %v316, 7
    %v318 = vsub.s32 %v315, %v317
    %v319 = vrot.slane %v303, %v318
    %v321 = vunpack.c.l.s4 1966171168
    %v322 = vunpack.c.0.s8 %v321
    %v323 = vlaneseq
    %v324 = vshrl.u32 %v323, 7
    %v325 = vsub.s32 %v322, %v324
    %v326 = vrot.slane %v310, %v325
    %v328 = vunpack.c.l.s4 1966171168
    %v329 = vunpack.c.0.s8 %v328
    %v330 = vlaneseq
    %v331 = vshrl.u32 %v330, 7
    %v332 = vsub.s32 %v329, %v331
    %v333 = vrot.slane %v311, %v332
    %v335 = vunpack.c.l.s4 1966171168
    %v336 = vunpack.c.0.s8 %v335
    %v337 = vlaneseq
    %v338 = vshrl.u32 %v337, 7
    %v339 = vsub.s32 %v336, %v338
    %v340 = vrot.slane %v312, %v339
    %v341 = vcombine.high %v319, %v319
    %v342 = vcombine.high %v326, %v326
    %v343 = vcombine.high %v333, %v333
    %v344 = vcombine.high %v340, %v340
    %346 = vset.pattern.permute.xlu0 0
    %347 = vperm.xlu0 %346, %v126
    %v348 = vpop.permute.xlu0 %347
    %351 = vset.pattern.permute.xlu0 0
    %352 = vperm.xlu0 %351, %v127
    %v353 = vpop.permute.xlu0 %352
    %v355 = vlaneseq
    %v356 = vshrl.u32 %v355, 7
    %v357 = vsub.s32 0, %v356
    %v358 = vrot.slane %v270, %v357
    %v359 = vlaneseq
    %v360 = vshrl.u32 %v359, 7
    %v361 = vsub.s32 0, %v360
    %v362 = vrot.slane %v284, %v361
    %v363 = vlaneseq
    %v364 = vshrl.u32 %v363, 7
    %v365 = vsub.s32 0, %v364
    %v366 = vrot.slane %v292, %v365
    %v367 = vlaneseq
    %v368 = vshrl.u32 %v367, 7
    %v369 = vsub.s32 0, %v368
    %v370 = vrot.slane %v294, %v369
    %v371 = vlaneseq
    %v372 = vshrl.u32 %v371, 7
    %v373 = vsub.s32 0, %v372
    %v374 = vrot.slane %v277, %v373
    %v375 = vlaneseq
    %v376 = vshrl.u32 %v375, 7
    %v377 = vsub.s32 0, %v376
    %v378 = vrot.slane %v291, %v377
    %v379 = vlaneseq
    %v380 = vshrl.u32 %v379, 7
    %v381 = vsub.s32 0, %v380
    %v382 = vrot.slane %v293, %v381
    %v383 = vlaneseq
    %v384 = vshrl.u32 %v383, 7
    %v385 = vsub.s32 0, %v384
    %v386 = vrot.slane %v295, %v385
    %v387 = vlaneseq
    %v388 = vshrl.u32 %v387, 7
    %v389 = vsub.s32 0, %v388
    %v390 = vrot.slane %v319, %v389
    %v391 = vlaneseq
    %v392 = vshrl.u32 %v391, 7
    %v393 = vsub.s32 0, %v392
    %v394 = vrot.slane %v333, %v393
    %v395 = vlaneseq
    %v396 = vshrl.u32 %v395, 7
    %v397 = vsub.s32 0, %v396
    %v398 = vrot.slane %v341, %v397
    %v399 = vlaneseq
    %v400 = vshrl.u32 %v399, 7
    %v401 = vsub.s32 0, %v400
    %v402 = vrot.slane %v343, %v401
    %v403 = vlaneseq
    %v404 = vshrl.u32 %v403, 7
    %v405 = vsub.s32 0, %v404
    %v406 = vrot.slane %v326, %v405
    %v407 = vlaneseq
    %v408 = vshrl.u32 %v407, 7
    %v409 = vsub.s32 0, %v408
    %v410 = vrot.slane %v340, %v409
    %v411 = vlaneseq
    %v412 = vshrl.u32 %v411, 7
    %v413 = vsub.s32 0, %v412
    %v414 = vrot.slane %v342, %v413
    %v415 = vlaneseq
    %v416 = vshrl.u32 %v415, 7
    %v417 = vsub.s32 0, %v416
    %v418 = vrot.slane %v344, %v417
    %v435 = vmul.f32 %v348, %v358
    %v436 = vmul.f32 %v353, %v358
    %v437 = vmul.f32 %v348, %v362
    %v438 = vmul.f32 %v353, %v362
    %v439 = vmul.f32 %v348, %v366
    %v440 = vmul.f32 %v353, %v366
    %v441 = vmul.f32 %v348, %v370
    %v442 = vmul.f32 %v353, %v370
    %v443 = vmul.f32 %v348, %v374
    %v444 = vmul.f32 %v353, %v374
    %v445 = vmul.f32 %v348, %v378
    %v446 = vmul.f32 %v353, %v378
    %v447 = vmul.f32 %v348, %v382
    %v448 = vmul.f32 %v353, %v382
    %v449 = vmul.f32 %v348, %v386
    %v450 = vmul.f32 %v353, %v386
    %v451 = vmul.f32 %v348, %v390
    %v452 = vmul.f32 %v353, %v390
    %v453 = vmul.f32 %v348, %v394
    %v454 = vmul.f32 %v353, %v394
    %v455 = vmul.f32 %v348, %v398
    %v456 = vmul.f32 %v353, %v398
    %v457 = vmul.f32 %v348, %v402
    %v458 = vmul.f32 %v353, %v402
    %v459 = vmul.f32 %v348, %v406
    %v460 = vmul.f32 %v353, %v406
    %v461 = vmul.f32 %v348, %v410
    %v462 = vmul.f32 %v353, %v410
    %v463 = vmul.f32 %v348, %v414
    %v464 = vmul.f32 %v353, %v414
    %v465 = vmul.f32 %v348, %v418
    %v466 = vmul.f32 %v353, %v418
    %v467 = vlaneseq
    %v468 = vshrl.u32 %v467, 7
    %v469 = vsub.s32 0, %v468
    %v470 = vrot.slane %v170, %v469
    %v471 = vlaneseq
    %v472 = vshrl.u32 %v471, 7
    %v473 = vsub.s32 0, %v472
    %v474 = vrot.slane %v184, %v473
    %v475 = vlaneseq
    %v476 = vshrl.u32 %v475, 7
    %v477 = vsub.s32 0, %v476
    %v478 = vrot.slane %v192, %v477
    %v479 = vlaneseq
    %v480 = vshrl.u32 %v479, 7
    %v481 = vsub.s32 0, %v480
    %v482 = vrot.slane %v194, %v481
    %v483 = vlaneseq
    %v484 = vshrl.u32 %v483, 7
    %v485 = vsub.s32 0, %v484
    %v486 = vrot.slane %v177, %v485
    %v487 = vlaneseq
    %v488 = vshrl.u32 %v487, 7
    %v489 = vsub.s32 0, %v488
    %v490 = vrot.slane %v191, %v489
    %v491 = vlaneseq
    %v492 = vshrl.u32 %v491, 7
    %v493 = vsub.s32 0, %v492
    %v494 = vrot.slane %v193, %v493
    %v495 = vlaneseq
    %v496 = vshrl.u32 %v495, 7
    %v497 = vsub.s32 0, %v496
    %v498 = vrot.slane %v195, %v497
    %v499 = vlaneseq
    %v500 = vshrl.u32 %v499, 7
    %v501 = vsub.s32 0, %v500
    %v502 = vrot.slane %v219, %v501
    %v503 = vlaneseq
    %v504 = vshrl.u32 %v503, 7
    %v505 = vsub.s32 0, %v504
    %v506 = vrot.slane %v233, %v505
    %v507 = vlaneseq
    %v508 = vshrl.u32 %v507, 7
    %v509 = vsub.s32 0, %v508
    %v510 = vrot.slane %v241, %v509
    %v511 = vlaneseq
    %v512 = vshrl.u32 %v511, 7
    %v513 = vsub.s32 0, %v512
    %v514 = vrot.slane %v243, %v513
    %v515 = vlaneseq
    %v516 = vshrl.u32 %v515, 7
    %v517 = vsub.s32 0, %v516
    %v518 = vrot.slane %v226, %v517
    %v519 = vlaneseq
    %v520 = vshrl.u32 %v519, 7
    %v521 = vsub.s32 0, %v520
    %v522 = vrot.slane %v240, %v521
    %v523 = vlaneseq
    %v524 = vshrl.u32 %v523, 7
    %v525 = vsub.s32 0, %v524
    %v526 = vrot.slane %v242, %v525
    %v527 = vlaneseq
    %v528 = vshrl.u32 %v527, 7
    %v529 = vsub.s32 0, %v528
    %v530 = vrot.slane %v244, %v529
    %v547 = vadd.f32 %v470, %v435
    %v548 = vadd.f32 %v470, %v436
    %v549 = vadd.f32 %v474, %v437
    %v550 = vadd.f32 %v474, %v438
    %v551 = vadd.f32 %v478, %v439
    %v552 = vadd.f32 %v478, %v440
    %v553 = vadd.f32 %v482, %v441
    %v554 = vadd.f32 %v482, %v442
    %v555 = vadd.f32 %v486, %v443
    %v556 = vadd.f32 %v486, %v444
    %v557 = vadd.f32 %v490, %v445
    %v558 = vadd.f32 %v490, %v446
    %v559 = vadd.f32 %v494, %v447
    %v560 = vadd.f32 %v494, %v448
    %v561 = vadd.f32 %v498, %v449
    %v562 = vadd.f32 %v498, %v450
    %v563 = vadd.f32 %v502, %v451
    %v564 = vadd.f32 %v502, %v452
    %v565 = vadd.f32 %v506, %v453
    %v566 = vadd.f32 %v506, %v454
    %v567 = vadd.f32 %v510, %v455
    %v568 = vadd.f32 %v510, %v456
    %v569 = vadd.f32 %v514, %v457
    %v570 = vadd.f32 %v514, %v458
    %v571 = vadd.f32 %v518, %v459
    %v572 = vadd.f32 %v518, %v460
    %v573 = vadd.f32 %v522, %v461
    %v574 = vadd.f32 %v522, %v462
    %v575 = vadd.f32 %v526, %v463
    %v576 = vadd.f32 %v526, %v464
    %v577 = vadd.f32 %v530, %v465
    %v578 = vadd.f32 %v530, %v466
    %v579 = vmax.f32 %v547, 0.0
    %v580 = vmax.f32 %v548, 0.0
    %v581 = vmax.f32 %v549, 0.0
    %v582 = vmax.f32 %v550, 0.0
    %v583 = vmax.f32 %v551, 0.0
    %v584 = vmax.f32 %v552, 0.0
    %v585 = vmax.f32 %v553, 0.0
    %v586 = vmax.f32 %v554, 0.0
    %v587 = vmax.f32 %v555, 0.0
    %v588 = vmax.f32 %v556, 0.0
    %v589 = vmax.f32 %v557, 0.0
    %v590 = vmax.f32 %v558, 0.0
    %v591 = vmax.f32 %v559, 0.0
    %v592 = vmax.f32 %v560, 0.0
    %v593 = vmax.f32 %v561, 0.0
    %v594 = vmax.f32 %v562, 0.0
    %v595 = vmax.f32 %v563, 0.0
    %v596 = vmax.f32 %v564, 0.0
    %v597 = vmax.f32 %v565, 0.0
    %v598 = vmax.f32 %v566, 0.0
    %v599 = vmax.f32 %v567, 0.0
    %v600 = vmax.f32 %v568, 0.0
    %v601 = vmax.f32 %v569, 0.0
    %v602 = vmax.f32 %v570, 0.0
    %v603 = vmax.f32 %v571, 0.0
    %v604 = vmax.f32 %v572, 0.0
    %v605 = vmax.f32 %v573, 0.0
    %v606 = vmax.f32 %v574, 0.0
    %v607 = vmax.f32 %v575, 0.0
    %v608 = vmax.f32 %v576, 0.0
    %v609 = vmax.f32 %v577, 0.0
    %v610 = vmax.f32 %v578, 0.0
    %v611 = vld [vmem:[#allocation2 + $0x30] sm:$0xff]
    %v612 = vld [vmem:[#allocation2 + $0x38] sm:$0xff]
    %v613 = vld [vmem:[#allocation2 + $0x40] sm:$0xff]
    %v614 = vld [vmem:[#allocation2 + $0x48] sm:$0xff]
    %v615 = vld [vmem:[#allocation2 + $0x1] sm:$0x1]
    %v616 = vlaneseq
    %v617 = vshrl.u32 %v616, 7
    %v618 = vsub.s32 0, %v617
    %v619 = vrot.slane %v615, %v618
    %vm620 = vcmask 261120
    %v622 = vsel %vm620, %v579, 0
    %v625 = vsel %vm620, %v580, 0
    %v628 = vsel %vm620, %v581, 0
    %v631 = vsel %vm620, %v582, 0
    %v634 = vsel %vm620, %v583, 0
    %v637 = vsel %vm620, %v584, 0
    %v640 = vsel %vm620, %v585, 0
    %v643 = vsel %vm620, %v586, 0
    %v646 = vsel %vm620, %v587, 0
    %v649 = vsel %vm620, %v588, 0
    %v652 = vsel %vm620, %v589, 0
    %v655 = vsel %vm620, %v590, 0
    %v658 = vsel %vm620, %v591, 0
    %v661 = vsel %vm620, %v592, 0
    %v664 = vsel %vm620, %v593, 0
    %v667 = vsel %vm620, %v594, 0
    %v670 = vsel %vm620, %v595, 0
    %v673 = vsel %vm620, %v596, 0
    %v676 = vsel %vm620, %v597, 0
    %v679 = vsel %vm620, %v598, 0
    %v682 = vsel %vm620, %v599, 0
    %v685 = vsel %vm620, %v600, 0
    %v688 = vsel %vm620, %v601, 0
    %v691 = vsel %vm620, %v602, 0
    %v694 = vsel %vm620, %v603, 0
    %v697 = vsel %vm620, %v604, 0
    %v700 = vsel %vm620, %v605, 0
    %v703 = vsel %vm620, %v606, 0
    %v706 = vsel %vm620, %v607, 0
    %v709 = vsel %vm620, %v608, 0
    %v712 = vsel %vm620, %v609, 0
    %v715 = vsel %vm620, %v610, 0
    %717 = vmatprep.subr.mxu0 0.0
    %718 = vmatpush1.msra.mxu0 0.0
    %719 = vmatprep.subr.mxu0 0.0
    %720 = vmatpush1.msra.mxu0 0.0
    %721 = vmatprep.subr.mxu0 0.0
    %722 = vmatpush1.msra.mxu0 0.0
    %723 = vmatprep.subr.mxu0 0.0
    %724 = vmatpush1.msra.mxu0 0.0
    %725 = vmatprep.subr.mxu0 0.0
    %726 = vmatpush1.msra.mxu0 0.0
    %727 = vmatprep.subr.mxu0 0.0
    %728 = vmatpush1.msra.mxu0 0.0
    %729 = vmatprep.subr.mxu0 0.0
    %730 = vmatpush1.msra.mxu0 0.0
    %731 = vmatprep.subr.mxu0 0.0
    %732 = vmatpush1.msra.mxu0 0.0
    %733 = vmatprep.subr.mxu0 0.0
    %734 = vmatpush1.msra.mxu0 0.0
    %735 = vmatprep.subr.mxu0 0.0
    %736 = vmatpush1.msra.mxu0 0.0
    %737 = vmatprep.subr.mxu0 0.0
    %738 = vmatpush1.msra.mxu0 0.0
    %739 = vmatprep.subr.mxu0 0.0
    %740 = vmatpush1.msra.mxu0 0.0
    %741 = vmatprep.subr.mxu0 0.0
    %742 = vmatpush1.msra.mxu0 %v614
    %743 = vmatprep.subr.mxu0 0.0
    %744 = vmatpush1.msra.mxu0 %v613
    %745 = vmatprep.subr.mxu0 0.0
    %746 = vmatpush1.msra.mxu0 %v612
    %747 = vmatprep.subr.mxu0 0.0
    %748 = vmatpush1.msra.mxu0 %v611
    %749 = vmatprep.subr.mxu0 0.0
    %750 = vmatpush2.msra.mxu0 0.0
    %751 = vmatprep.subr.mxu0 0.0
    %752 = vmatpush2.msra.mxu0 0.0
    %753 = vmatprep.subr.mxu0 0.0
    %754 = vmatpush2.msra.mxu0 0.0
    %755 = vmatprep.subr.mxu0 0.0
    %756 = vmatpush2.msra.mxu0 0.0
    %757 = vmatprep.subr.mxu0 0.0
    %758 = vmatpush2.msra.mxu0 0.0
    %759 = vmatprep.subr.mxu0 0.0
    %760 = vmatpush2.msra.mxu0 0.0
    %761 = vmatprep.subr.mxu0 0.0
    %762 = vmatpush2.msra.mxu0 0.0
    %763 = vmatprep.subr.mxu0 0.0
    %764 = vmatpush2.msra.mxu0 0.0
    %765 = vmatprep.subr.mxu0 0.0
    %766 = vmatpush2.msra.mxu0 0.0
    %767 = vmatprep.subr.mxu0 0.0
    %768 = vmatpush2.msra.mxu0 0.0
    %769 = vmatprep.subr.mxu0 0.0
    %770 = vmatpush2.msra.mxu0 0.0
    %771 = vmatprep.subr.mxu0 0.0
    %772 = vmatpush2.msra.mxu0 0.0
    %773 = vmatprep.subr.mxu0 0.0
    %774 = vmatpush2.msra.mxu0 0.0
    %775 = vmatprep.subr.mxu0 0.0
    %776 = vmatpush2.msra.mxu0 0.0
    %777 = vmatprep.subr.mxu0 0.0
    %778 = vmatpush2.msra.mxu0 0.0
    %779 = vmatprep.subr.mxu0 0.0
    %780 = vmatpush2.msra.mxu0 0.0
    %781 = vmatprep.mubr.f32.mxu0 0.0
    %782 = vmatmul.mubr.f32.gmra.mxu0 %v622
    %v783 = vpop.f32.mrf.mxu0
    %v784 = vadd.f32 %v619, %v783
    %v785 = vpop.f32.mrf.mxu0
    %786 = vmatprep.mubr.f32.mxu0 0.0
    %787 = vmatmul.mubr.f32.gmra.mxu0 %v625
    %v788 = vpop.f32.mrf.mxu0
    %v789 = vadd.f32 %v619, %v788
    %v790 = vpop.f32.mrf.mxu0
    %791 = vmatprep.mubr.f32.mxu0 0.0
    %792 = vmatmul.mubr.f32.gmra.mxu0 %v628
    %v793 = vpop.f32.mrf.mxu0
    %v794 = vadd.f32 %v619, %v793
    %v795 = vpop.f32.mrf.mxu0
    %796 = vmatprep.mubr.f32.mxu0 0.0
    %797 = vmatmul.mubr.f32.gmra.mxu0 %v631
    %v798 = vpop.f32.mrf.mxu0
    %v799 = vadd.f32 %v619, %v798
    %v800 = vpop.f32.mrf.mxu0
    %801 = vmatprep.mubr.f32.mxu0 0.0
    %802 = vmatmul.mubr.f32.gmra.mxu0 %v634
    %v803 = vpop.f32.mrf.mxu0
    %v804 = vadd.f32 %v619, %v803
    %v805 = vpop.f32.mrf.mxu0
    %806 = vmatprep.mubr.f32.mxu0 0.0
    %807 = vmatmul.mubr.f32.gmra.mxu0 %v637
    %v808 = vpop.f32.mrf.mxu0
    %v809 = vadd.f32 %v619, %v808
    %v810 = vpop.f32.mrf.mxu0
    %811 = vmatprep.mubr.f32.mxu0 0.0
    %812 = vmatmul.mubr.f32.gmra.mxu0 %v640
    %v813 = vpop.f32.mrf.mxu0
    %v814 = vadd.f32 %v619, %v813
    %v815 = vpop.f32.mrf.mxu0
    %816 = vmatprep.mubr.f32.mxu0 0.0
    %817 = vmatmul.mubr.f32.gmra.mxu0 %v643
    %v818 = vpop.f32.mrf.mxu0
    %v819 = vadd.f32 %v619, %v818
    %v820 = vpop.f32.mrf.mxu0
    %821 = vmatprep.mubr.f32.mxu0 0.0
    %822 = vmatmul.mubr.f32.gmra.mxu0 %v646
    %v823 = vpop.f32.mrf.mxu0
    %v824 = vadd.f32 %v619, %v823
    %v825 = vpop.f32.mrf.mxu0
    %826 = vmatprep.mubr.f32.mxu0 0.0
    %827 = vmatmul.mubr.f32.gmra.mxu0 %v649
    %v828 = vpop.f32.mrf.mxu0
    %v829 = vadd.f32 %v619, %v828
    %v830 = vpop.f32.mrf.mxu0
    %831 = vmatprep.mubr.f32.mxu0 0.0
    %832 = vmatmul.mubr.f32.gmra.mxu0 %v652
    %v833 = vpop.f32.mrf.mxu0
    %v834 = vadd.f32 %v619, %v833
    %v835 = vpop.f32.mrf.mxu0
    %836 = vmatprep.mubr.f32.mxu0 0.0
    %837 = vmatmul.mubr.f32.gmra.mxu0 %v655
    %v838 = vpop.f32.mrf.mxu0
    %v839 = vadd.f32 %v619, %v838
    %v840 = vpop.f32.mrf.mxu0
    %841 = vmatprep.mubr.f32.mxu0 0.0
    %842 = vmatmul.mubr.f32.gmra.mxu0 %v658
    %v843 = vpop.f32.mrf.mxu0
    %v844 = vadd.f32 %v619, %v843
    %v845 = vpop.f32.mrf.mxu0
    %846 = vmatprep.mubr.f32.mxu0 0.0
    %847 = vmatmul.mubr.f32.gmra.mxu0 %v661
    %v848 = vpop.f32.mrf.mxu0
    %v849 = vadd.f32 %v619, %v848
    %v850 = vpop.f32.mrf.mxu0
    %851 = vmatprep.mubr.f32.mxu0 0.0
    %852 = vmatmul.mubr.f32.gmra.mxu0 %v664
    %v853 = vpop.f32.mrf.mxu0
    %v854 = vadd.f32 %v619, %v853
    %v855 = vpop.f32.mrf.mxu0
    %856 = vmatprep.mubr.f32.mxu0 0.0
    %857 = vmatmul.mubr.f32.gmra.mxu0 %v667
    %v858 = vpop.f32.mrf.mxu0
    %v859 = vadd.f32 %v619, %v858
    %v860 = vpop.f32.mrf.mxu0
    %861 = vmatprep.mubr.f32.mxu0 0.0
    %862 = vmatmul.mubr.f32.gmra.mxu0 %v670
    %v863 = vpop.f32.mrf.mxu0
    %v864 = vadd.f32 %v619, %v863
    %v865 = vpop.f32.mrf.mxu0
    %866 = vmatprep.mubr.f32.mxu0 0.0
    %867 = vmatmul.mubr.f32.gmra.mxu0 %v673
    %v868 = vpop.f32.mrf.mxu0
    %v869 = vadd.f32 %v619, %v868
    %v870 = vpop.f32.mrf.mxu0
    %871 = vmatprep.mubr.f32.mxu0 0.0
    %872 = vmatmul.mubr.f32.gmra.mxu0 %v676
    %v873 = vpop.f32.mrf.mxu0
    %v874 = vadd.f32 %v619, %v873
    %v875 = vpop.f32.mrf.mxu0
    %876 = vmatprep.mubr.f32.mxu0 0.0
    %877 = vmatmul.mubr.f32.gmra.mxu0 %v679
    %v878 = vpop.f32.mrf.mxu0
    %v879 = vadd.f32 %v619, %v878
    %v880 = vpop.f32.mrf.mxu0
    %881 = vmatprep.mubr.f32.mxu0 0.0
    %882 = vmatmul.mubr.f32.gmra.mxu0 %v682
    %v883 = vpop.f32.mrf.mxu0
    %v884 = vadd.f32 %v619, %v883
    %v885 = vpop.f32.mrf.mxu0
    %886 = vmatprep.mubr.f32.mxu0 0.0
    %887 = vmatmul.mubr.f32.gmra.mxu0 %v685
    %v888 = vpop.f32.mrf.mxu0
    %v889 = vadd.f32 %v619, %v888
    %v890 = vpop.f32.mrf.mxu0
    %891 = vmatprep.mubr.f32.mxu0 0.0
    %892 = vmatmul.mubr.f32.gmra.mxu0 %v688
    %v893 = vpop.f32.mrf.mxu0
    %v894 = vadd.f32 %v619, %v893
    %v895 = vpop.f32.mrf.mxu0
    %896 = vmatprep.mubr.f32.mxu0 0.0
    %897 = vmatmul.mubr.f32.gmra.mxu0 %v691
    %v898 = vpop.f32.mrf.mxu0
    %v899 = vadd.f32 %v619, %v898
    %v900 = vpop.f32.mrf.mxu0
    %901 = vmatprep.mubr.f32.mxu0 0.0
    %902 = vmatmul.mubr.f32.gmra.mxu0 %v694
    %v903 = vpop.f32.mrf.mxu0
    %v904 = vadd.f32 %v619, %v903
    %v905 = vpop.f32.mrf.mxu0
    %906 = vmatprep.mubr.f32.mxu0 0.0
    %907 = vmatmul.mubr.f32.gmra.mxu0 %v697
    %v908 = vpop.f32.mrf.mxu0
    %v909 = vadd.f32 %v619, %v908
    %v910 = vpop.f32.mrf.mxu0
    %911 = vmatprep.mubr.f32.mxu0 0.0
    %912 = vmatmul.mubr.f32.gmra.mxu0 %v700
    %v913 = vpop.f32.mrf.mxu0
    %v914 = vadd.f32 %v619, %v913
    %v915 = vpop.f32.mrf.mxu0
    %916 = vmatprep.mubr.f32.mxu0 0.0
    %917 = vmatmul.mubr.f32.gmra.mxu0 %v703
    %v918 = vpop.f32.mrf.mxu0
    %v919 = vadd.f32 %v619, %v918
    %v920 = vpop.f32.mrf.mxu0
    %921 = vmatprep.mubr.f32.mxu0 0.0
    %922 = vmatmul.mubr.f32.gmra.mxu0 %v706
    %v923 = vpop.f32.mrf.mxu0
    %v924 = vadd.f32 %v619, %v923
    %v925 = vpop.f32.mrf.mxu0
    %926 = vmatprep.mubr.f32.mxu0 0.0
    %927 = vmatmul.mubr.f32.gmra.mxu0 %v709
    %v928 = vpop.f32.mrf.mxu0
    %v929 = vadd.f32 %v619, %v928
    %v930 = vpop.f32.mrf.mxu0
    %931 = vmatprep.mubr.f32.mxu0 0.0
    %932 = vmatmul.mubr.f32.gmra.mxu0 %v712
    %v933 = vpop.f32.mrf.mxu0
    %v934 = vadd.f32 %v619, %v933
    %v935 = vpop.f32.mrf.mxu0
    %936 = vmatprep.mubr.f32.mxu0 0.0
    %937 = vmatmul.mubr.f32.gmra.mxu0 %v715
    %v938 = vpop.f32.mrf.mxu0
    %v939 = vadd.f32 %v619, %v938
    %v940 = vpop.f32.mrf.mxu0
    %941 = vdwg.mxu0
    %v942 = vmax.f32 %v784, 0.0
    %v943 = vmax.f32 %v789, 0.0
    %v944 = vmax.f32 %v794, 0.0
    %v945 = vmax.f32 %v799, 0.0
    %v946 = vmax.f32 %v804, 0.0
    %v947 = vmax.f32 %v809, 0.0
    %v948 = vmax.f32 %v814, 0.0
    %v949 = vmax.f32 %v819, 0.0
    %v950 = vmax.f32 %v824, 0.0
    %v951 = vmax.f32 %v829, 0.0
    %v952 = vmax.f32 %v834, 0.0
    %v953 = vmax.f32 %v839, 0.0
    %v954 = vmax.f32 %v844, 0.0
    %v955 = vmax.f32 %v849, 0.0
    %v956 = vmax.f32 %v854, 0.0
    %v957 = vmax.f32 %v859, 0.0
    %v958 = vmax.f32 %v864, 0.0
    %v959 = vmax.f32 %v869, 0.0
    %v960 = vmax.f32 %v874, 0.0
    %v961 = vmax.f32 %v879, 0.0
    %v962 = vmax.f32 %v884, 0.0
    %v963 = vmax.f32 %v889, 0.0
    %v964 = vmax.f32 %v894, 0.0
    %v965 = vmax.f32 %v899, 0.0
    %v966 = vmax.f32 %v904, 0.0
    %v967 = vmax.f32 %v909, 0.0
    %v968 = vmax.f32 %v914, 0.0
    %v969 = vmax.f32 %v919, 0.0
    %v970 = vmax.f32 %v924, 0.0
    %v971 = vmax.f32 %v929, 0.0
    %v972 = vmax.f32 %v934, 0.0
    %v973 = vmax.f32 %v939, 0.0
    %v974 = vld [vmem:[#allocation2 + $0x70] sm:$0xff]
    %v975 = vld [vmem:[#allocation2 + $0x78] sm:$0xff]
    %v976 = vld [vmem:[#allocation2 + $0x80] sm:$0xff]
    %v977 = vld [vmem:[#allocation2 + $0x88] sm:$0xff]
    %v978 = vld [vmem:[#allocation2 + $0x3] sm:$0x1]
    %v979 = vlaneseq
    %v980 = vshrl.u32 %v979, 7
    %v981 = vsub.s32 0, %v980
    %v982 = vrot.slane %v978, %v981
    %v984 = vsel %vm620, %v942, 0
    %v987 = vsel %vm620, %v943, 0
    %v990 = vsel %vm620, %v944, 0
    %v993 = vsel %vm620, %v945, 0
    %v996 = vsel %vm620, %v946, 0
    %v999 = vsel %vm620, %v947, 0
    %v1002 = vsel %vm620, %v948, 0
    %v1005 = vsel %vm620, %v949, 0
    %v1008 = vsel %vm620, %v950, 0
    %v1011 = vsel %vm620, %v951, 0
    %v1014 = vsel %vm620, %v952, 0
    %v1017 = vsel %vm620, %v953, 0
    %v1020 = vsel %vm620, %v954, 0
    %v1023 = vsel %vm620, %v955, 0
    %v1026 = vsel %vm620, %v956, 0
    %v1029 = vsel %vm620, %v957, 0
    %v1032 = vsel %vm620, %v958, 0
    %v1035 = vsel %vm620, %v959, 0
    %v1038 = vsel %vm620, %v960, 0
    %v1041 = vsel %vm620, %v961, 0
    %v1044 = vsel %vm620, %v962, 0
    %v1047 = vsel %vm620, %v963, 0
    %v1050 = vsel %vm620, %v964, 0
    %v1053 = vsel %vm620, %v965, 0
    %v1056 = vsel %vm620, %v966, 0
    %v1059 = vsel %vm620, %v967, 0
    %v1062 = vsel %vm620, %v968, 0
    %v1065 = vsel %vm620, %v969, 0
    %v1068 = vsel %vm620, %v970, 0
    %v1071 = vsel %vm620, %v971, 0
    %v1074 = vsel %vm620, %v972, 0
    %v1077 = vsel %vm620, %v973, 0
    %1079 = vmatprep.subr.mxu0 0.0
    %1080 = vmatpush1.msra.mxu0 0.0
    %1081 = vmatprep.subr.mxu0 0.0
    %1082 = vmatpush1.msra.mxu0 0.0
    %1083 = vmatprep.subr.mxu0 0.0
    %1084 = vmatpush1.msra.mxu0 0.0
    %1085 = vmatprep.subr.mxu0 0.0
    %1086 = vmatpush1.msra.mxu0 0.0
    %1087 = vmatprep.subr.mxu0 0.0
    %1088 = vmatpush1.msra.mxu0 0.0
    %1089 = vmatprep.subr.mxu0 0.0
    %1090 = vmatpush1.msra.mxu0 0.0
    %1091 = vmatprep.subr.mxu0 0.0
    %1092 = vmatpush1.msra.mxu0 0.0
    %1093 = vmatprep.subr.mxu0 0.0
    %1094 = vmatpush1.msra.mxu0 0.0
    %1095 = vmatprep.subr.mxu0 0.0
    %1096 = vmatpush1.msra.mxu0 0.0
    %1097 = vmatprep.subr.mxu0 0.0
    %1098 = vmatpush1.msra.mxu0 0.0
    %1099 = vmatprep.subr.mxu0 0.0
    %1100 = vmatpush1.msra.mxu0 0.0
    %1101 = vmatprep.subr.mxu0 0.0
    %1102 = vmatpush1.msra.mxu0 0.0
    %1103 = vmatprep.subr.mxu0 0.0
    %1104 = vmatpush1.msra.mxu0 %v977
    %1105 = vmatprep.subr.mxu0 0.0
    %1106 = vmatpush1.msra.mxu0 %v976
    %1107 = vmatprep.subr.mxu0 0.0
    %1108 = vmatpush1.msra.mxu0 %v975
    %1109 = vmatprep.subr.mxu0 0.0
    %1110 = vmatpush1.msra.mxu0 %v974
    %1111 = vmatprep.subr.mxu0 0.0
    %1112 = vmatpush2.msra.mxu0 0.0
    %1113 = vmatprep.subr.mxu0 0.0
    %1114 = vmatpush2.msra.mxu0 0.0
    %1115 = vmatprep.subr.mxu0 0.0
    %1116 = vmatpush2.msra.mxu0 0.0
    %1117 = vmatprep.subr.mxu0 0.0
    %1118 = vmatpush2.msra.mxu0 0.0
    %1119 = vmatprep.subr.mxu0 0.0
    %1120 = vmatpush2.msra.mxu0 0.0
    %1121 = vmatprep.subr.mxu0 0.0
    %1122 = vmatpush2.msra.mxu0 0.0
    %1123 = vmatprep.subr.mxu0 0.0
    %1124 = vmatpush2.msra.mxu0 0.0
    %1125 = vmatprep.subr.mxu0 0.0
    %1126 = vmatpush2.msra.mxu0 0.0
    %1127 = vmatprep.subr.mxu0 0.0
    %1128 = vmatpush2.msra.mxu0 0.0
    %1129 = vmatprep.subr.mxu0 0.0
    %1130 = vmatpush2.msra.mxu0 0.0
    %1131 = vmatprep.subr.mxu0 0.0
    %1132 = vmatpush2.msra.mxu0 0.0
    %1133 = vmatprep.subr.mxu0 0.0
    %1134 = vmatpush2.msra.mxu0 0.0
    %1135 = vmatprep.subr.mxu0 0.0
    %1136 = vmatpush2.msra.mxu0 0.0
    %1137 = vmatprep.subr.mxu0 0.0
    %1138 = vmatpush2.msra.mxu0 0.0
    %1139 = vmatprep.subr.mxu0 0.0
    %1140 = vmatpush2.msra.mxu0 0.0
    %1141 = vmatprep.subr.mxu0 0.0
    %1142 = vmatpush2.msra.mxu0 0.0
    %1143 = vmatprep.mubr.f32.mxu0 0.0
    %1144 = vmatmul.mubr.f32.gmra.mxu0 %v984
    %v1145 = vpop.f32.mrf.mxu0
    %v1146 = vadd.f32 %v982, %v1145
    %v1147 = vpop.f32.mrf.mxu0
    %1148 = vmatprep.mubr.f32.mxu0 0.0
    %1149 = vmatmul.mubr.f32.gmra.mxu0 %v987
    %v1150 = vpop.f32.mrf.mxu0
    %v1151 = vadd.f32 %v982, %v1150
    %v1152 = vpop.f32.mrf.mxu0
    %1153 = vmatprep.mubr.f32.mxu0 0.0
    %1154 = vmatmul.mubr.f32.gmra.mxu0 %v990
    %v1155 = vpop.f32.mrf.mxu0
    %v1156 = vadd.f32 %v982, %v1155
    %v1157 = vpop.f32.mrf.mxu0
    %1158 = vmatprep.mubr.f32.mxu0 0.0
    %1159 = vmatmul.mubr.f32.gmra.mxu0 %v993
    %v1160 = vpop.f32.mrf.mxu0
    %v1161 = vadd.f32 %v982, %v1160
    %v1162 = vpop.f32.mrf.mxu0
    %1163 = vmatprep.mubr.f32.mxu0 0.0
    %1164 = vmatmul.mubr.f32.gmra.mxu0 %v996
    %v1165 = vpop.f32.mrf.mxu0
    %v1166 = vadd.f32 %v982, %v1165
    %v1167 = vpop.f32.mrf.mxu0
    %1168 = vmatprep.mubr.f32.mxu0 0.0
    %1169 = vmatmul.mubr.f32.gmra.mxu0 %v999
    %v1170 = vpop.f32.mrf.mxu0
    %v1171 = vadd.f32 %v982, %v1170
    %v1172 = vpop.f32.mrf.mxu0
    %1173 = vmatprep.mubr.f32.mxu0 0.0
    %1174 = vmatmul.mubr.f32.gmra.mxu0 %v1002
    %v1175 = vpop.f32.mrf.mxu0
    %v1176 = vadd.f32 %v982, %v1175
    %v1177 = vpop.f32.mrf.mxu0
    %1178 = vmatprep.mubr.f32.mxu0 0.0
    %1179 = vmatmul.mubr.f32.gmra.mxu0 %v1005
    %v1180 = vpop.f32.mrf.mxu0
    %v1181 = vadd.f32 %v982, %v1180
    %v1182 = vpop.f32.mrf.mxu0
    %1183 = vmatprep.mubr.f32.mxu0 0.0
    %1184 = vmatmul.mubr.f32.gmra.mxu0 %v1008
    %v1185 = vpop.f32.mrf.mxu0
    %v1186 = vadd.f32 %v982, %v1185
    %v1187 = vpop.f32.mrf.mxu0
    %1188 = vmatprep.mubr.f32.mxu0 0.0
    %1189 = vmatmul.mubr.f32.gmra.mxu0 %v1011
    %v1190 = vpop.f32.mrf.mxu0
    %v1191 = vadd.f32 %v982, %v1190
    %v1192 = vpop.f32.mrf.mxu0
    %1193 = vmatprep.mubr.f32.mxu0 0.0
    %1194 = vmatmul.mubr.f32.gmra.mxu0 %v1014
    %v1195 = vpop.f32.mrf.mxu0
    %v1196 = vadd.f32 %v982, %v1195
    %v1197 = vpop.f32.mrf.mxu0
    %1198 = vmatprep.mubr.f32.mxu0 0.0
    %1199 = vmatmul.mubr.f32.gmra.mxu0 %v1017
    %v1200 = vpop.f32.mrf.mxu0
    %v1201 = vadd.f32 %v982, %v1200
    %v1202 = vpop.f32.mrf.mxu0
    %1203 = vmatprep.mubr.f32.mxu0 0.0
    %1204 = vmatmul.mubr.f32.gmra.mxu0 %v1020
    %v1205 = vpop.f32.mrf.mxu0
    %v1206 = vadd.f32 %v982, %v1205
    %v1207 = vpop.f32.mrf.mxu0
    %1208 = vmatprep.mubr.f32.mxu0 0.0
    %1209 = vmatmul.mubr.f32.gmra.mxu0 %v1023
    %v1210 = vpop.f32.mrf.mxu0
    %v1211 = vadd.f32 %v982, %v1210
    %v1212 = vpop.f32.mrf.mxu0
    %1213 = vmatprep.mubr.f32.mxu0 0.0
    %1214 = vmatmul.mubr.f32.gmra.mxu0 %v1026
    %v1215 = vpop.f32.mrf.mxu0
    %v1216 = vadd.f32 %v982, %v1215
    %v1217 = vpop.f32.mrf.mxu0
    %1218 = vmatprep.mubr.f32.mxu0 0.0
    %1219 = vmatmul.mubr.f32.gmra.mxu0 %v1029
    %v1220 = vpop.f32.mrf.mxu0
    %v1221 = vadd.f32 %v982, %v1220
    %v1222 = vpop.f32.mrf.mxu0
    %1223 = vmatprep.mubr.f32.mxu0 0.0
    %1224 = vmatmul.mubr.f32.gmra.mxu0 %v1032
    %v1225 = vpop.f32.mrf.mxu0
    %v1226 = vadd.f32 %v982, %v1225
    %v1227 = vpop.f32.mrf.mxu0
    %1228 = vmatprep.mubr.f32.mxu0 0.0
    %1229 = vmatmul.mubr.f32.gmra.mxu0 %v1035
    %v1230 = vpop.f32.mrf.mxu0
    %v1231 = vadd.f32 %v982, %v1230
    %v1232 = vpop.f32.mrf.mxu0
    %1233 = vmatprep.mubr.f32.mxu0 0.0
    %1234 = vmatmul.mubr.f32.gmra.mxu0 %v1038
    %v1235 = vpop.f32.mrf.mxu0
    %v1236 = vadd.f32 %v982, %v1235
    %v1237 = vpop.f32.mrf.mxu0
    %1238 = vmatprep.mubr.f32.mxu0 0.0
    %1239 = vmatmul.mubr.f32.gmra.mxu0 %v1041
    %v1240 = vpop.f32.mrf.mxu0
    %v1241 = vadd.f32 %v982, %v1240
    %v1242 = vpop.f32.mrf.mxu0
    %1243 = vmatprep.mubr.f32.mxu0 0.0
    %1244 = vmatmul.mubr.f32.gmra.mxu0 %v1044
    %v1245 = vpop.f32.mrf.mxu0
    %v1246 = vadd.f32 %v982, %v1245
    %v1247 = vpop.f32.mrf.mxu0
    %1248 = vmatprep.mubr.f32.mxu0 0.0
    %1249 = vmatmul.mubr.f32.gmra.mxu0 %v1047
    %v1250 = vpop.f32.mrf.mxu0
    %v1251 = vadd.f32 %v982, %v1250
    %v1252 = vpop.f32.mrf.mxu0
    %1253 = vmatprep.mubr.f32.mxu0 0.0
    %1254 = vmatmul.mubr.f32.gmra.mxu0 %v1050
    %v1255 = vpop.f32.mrf.mxu0
    %v1256 = vadd.f32 %v982, %v1255
    %v1257 = vpop.f32.mrf.mxu0
    %1258 = vmatprep.mubr.f32.mxu0 0.0
    %1259 = vmatmul.mubr.f32.gmra.mxu0 %v1053
    %v1260 = vpop.f32.mrf.mxu0
    %v1261 = vadd.f32 %v982, %v1260
    %v1262 = vpop.f32.mrf.mxu0
    %1263 = vmatprep.mubr.f32.mxu0 0.0
    %1264 = vmatmul.mubr.f32.gmra.mxu0 %v1056
    %v1265 = vpop.f32.mrf.mxu0
    %v1266 = vadd.f32 %v982, %v1265
    %v1267 = vpop.f32.mrf.mxu0
    %1268 = vmatprep.mubr.f32.mxu0 0.0
    %1269 = vmatmul.mubr.f32.gmra.mxu0 %v1059
    %v1270 = vpop.f32.mrf.mxu0
    %v1271 = vadd.f32 %v982, %v1270
    %v1272 = vpop.f32.mrf.mxu0
    %1273 = vmatprep.mubr.f32.mxu0 0.0
    %1274 = vmatmul.mubr.f32.gmra.mxu0 %v1062
    %v1275 = vpop.f32.mrf.mxu0
    %v1276 = vadd.f32 %v982, %v1275
    %v1277 = vpop.f32.mrf.mxu0
    %1278 = vmatprep.mubr.f32.mxu0 0.0
    %1279 = vmatmul.mubr.f32.gmra.mxu0 %v1065
    %v1280 = vpop.f32.mrf.mxu0
    %v1281 = vadd.f32 %v982, %v1280
    %v1282 = vpop.f32.mrf.mxu0
    %1283 = vmatprep.mubr.f32.mxu0 0.0
    %1284 = vmatmul.mubr.f32.gmra.mxu0 %v1068
    %v1285 = vpop.f32.mrf.mxu0
    %v1286 = vadd.f32 %v982, %v1285
    %v1287 = vpop.f32.mrf.mxu0
    %1288 = vmatprep.mubr.f32.mxu0 0.0
    %1289 = vmatmul.mubr.f32.gmra.mxu0 %v1071
    %v1290 = vpop.f32.mrf.mxu0
    %v1291 = vadd.f32 %v982, %v1290
    %v1292 = vpop.f32.mrf.mxu0
    %1293 = vmatprep.mubr.f32.mxu0 0.0
    %1294 = vmatmul.mubr.f32.gmra.mxu0 %v1074
    %v1295 = vpop.f32.mrf.mxu0
    %v1296 = vadd.f32 %v982, %v1295
    %v1297 = vpop.f32.mrf.mxu0
    %1298 = vmatprep.mubr.f32.mxu0 0.0
    %1299 = vmatmul.mubr.f32.gmra.mxu0 %v1077
    %v1300 = vpop.f32.mrf.mxu0
    %v1301 = vadd.f32 %v982, %v1300
    %v1302 = vpop.f32.mrf.mxu0
    %1303 = vdwg.mxu0
    %vm1304 = vcmp.gt.f32.partialorder %v1146, 0.0
    %vm1305 = vcmp.gt.f32.partialorder %v1151, 0.0
    %vm1306 = vcmp.gt.f32.partialorder %v1156, 0.0
    %vm1307 = vcmp.gt.f32.partialorder %v1161, 0.0
    %vm1308 = vcmp.gt.f32.partialorder %v1166, 0.0
    %vm1309 = vcmp.gt.f32.partialorder %v1171, 0.0
    %vm1310 = vcmp.gt.f32.partialorder %v1176, 0.0
    %vm1311 = vcmp.gt.f32.partialorder %v1181, 0.0
    %vm1312 = vcmp.gt.f32.partialorder %v1186, 0.0
    %vm1313 = vcmp.gt.f32.partialorder %v1191, 0.0
    %vm1314 = vcmp.gt.f32.partialorder %v1196, 0.0
    %vm1315 = vcmp.gt.f32.partialorder %v1201, 0.0
    %vm1316 = vcmp.gt.f32.partialorder %v1206, 0.0
    %vm1317 = vcmp.gt.f32.partialorder %v1211, 0.0
    %vm1318 = vcmp.gt.f32.partialorder %v1216, 0.0
    %vm1319 = vcmp.gt.f32.partialorder %v1221, 0.0
    %vm1320 = vcmp.gt.f32.partialorder %v1226, 0.0
    %vm1321 = vcmp.gt.f32.partialorder %v1231, 0.0
    %vm1322 = vcmp.gt.f32.partialorder %v1236, 0.0
    %vm1323 = vcmp.gt.f32.partialorder %v1241, 0.0
    %vm1324 = vcmp.gt.f32.partialorder %v1246, 0.0
    %vm1325 = vcmp.gt.f32.partialorder %v1251, 0.0
    %vm1326 = vcmp.gt.f32.partialorder %v1256, 0.0
    %vm1327 = vcmp.gt.f32.partialorder %v1261, 0.0
    %vm1328 = vcmp.gt.f32.partialorder %v1266, 0.0
    %vm1329 = vcmp.gt.f32.partialorder %v1271, 0.0
    %vm1330 = vcmp.gt.f32.partialorder %v1276, 0.0
    %vm1331 = vcmp.gt.f32.partialorder %v1281, 0.0
    %vm1332 = vcmp.gt.f32.partialorder %v1286, 0.0
    %vm1333 = vcmp.gt.f32.partialorder %v1291, 0.0
    %vm1334 = vcmp.gt.f32.partialorder %v1296, 0.0
    %vm1335 = vcmp.gt.f32.partialorder %v1301, 0.0
    %v1336 = vmul.f32 %v1146, 1.442695
    %v1337 = vpow.pop %v1336
    %v1338 = vmul.f32 %v1151, 1.442695
    %v1339 = vpow.pop %v1338
    %v1340 = vmul.f32 %v1156, 1.442695
    %v1341 = vpow.pop %v1340
    %v1342 = vmul.f32 %v1161, 1.442695
    %v1343 = vpow.pop %v1342
    %v1344 = vmul.f32 %v1166, 1.442695
    %v1345 = vpow.pop %v1344
    %v1346 = vmul.f32 %v1171, 1.442695
    %v1347 = vpow.pop %v1346
    %v1348 = vmul.f32 %v1176, 1.442695
    %v1349 = vpow.pop %v1348
    %v1350 = vmul.f32 %v1181, 1.442695
    %v1351 = vpow.pop %v1350
    %v1352 = vmul.f32 %v1186, 1.442695
    %v1353 = vpow.pop %v1352
    %v1354 = vmul.f32 %v1191, 1.442695
    %v1355 = vpow.pop %v1354
    %v1356 = vmul.f32 %v1196, 1.442695
    %v1357 = vpow.pop %v1356
    %v1358 = vmul.f32 %v1201, 1.442695
    %v1359 = vpow.pop %v1358
    %v1360 = vmul.f32 %v1206, 1.442695
    %v1361 = vpow.pop %v1360
    %v1362 = vmul.f32 %v1211, 1.442695
    %v1363 = vpow.pop %v1362
    %v1364 = vmul.f32 %v1216, 1.442695
    %v1365 = vpow.pop %v1364
    %v1366 = vmul.f32 %v1221, 1.442695
    %v1367 = vpow.pop %v1366
    %v1368 = vmul.f32 %v1226, 1.442695
    %v1369 = vpow.pop %v1368
    %v1370 = vmul.f32 %v1231, 1.442695
    %v1371 = vpow.pop %v1370
    %v1372 = vmul.f32 %v1236, 1.442695
    %v1373 = vpow.pop %v1372
    %v1374 = vmul.f32 %v1241, 1.442695
    %v1375 = vpow.pop %v1374
    %v1376 = vmul.f32 %v1246, 1.442695
    %v1377 = vpow.pop %v1376
    %v1378 = vmul.f32 %v1251, 1.442695
    %v1379 = vpow.pop %v1378
    %v1380 = vmul.f32 %v1256, 1.442695
    %v1381 = vpow.pop %v1380
    %v1382 = vmul.f32 %v1261, 1.442695
    %v1383 = vpow.pop %v1382
    %v1384 = vmul.f32 %v1266, 1.442695
    %v1385 = vpow.pop %v1384
    %v1386 = vmul.f32 %v1271, 1.442695
    %v1387 = vpow.pop %v1386
    %v1388 = vmul.f32 %v1276, 1.442695
    %v1389 = vpow.pop %v1388
    %v1390 = vmul.f32 %v1281, 1.442695
    %v1391 = vpow.pop %v1390
    %v1392 = vmul.f32 %v1286, 1.442695
    %v1393 = vpow.pop %v1392
    %v1394 = vmul.f32 %v1291, 1.442695
    %v1395 = vpow.pop %v1394
    %v1396 = vmul.f32 %v1296, 1.442695
    %v1397 = vpow.pop %v1396
    %v1398 = vmul.f32 %v1301, 1.442695
    %v1399 = vpow.pop %v1398
    %v1400 = vsub.f32 %v1337, 1.0
    %v1401 = vsub.f32 %v1339, 1.0
    %v1402 = vsub.f32 %v1341, 1.0
    %v1403 = vsub.f32 %v1343, 1.0
    %v1404 = vsub.f32 %v1345, 1.0
    %v1405 = vsub.f32 %v1347, 1.0
    %v1406 = vsub.f32 %v1349, 1.0
    %v1407 = vsub.f32 %v1351, 1.0
    %v1408 = vsub.f32 %v1353, 1.0
    %v1409 = vsub.f32 %v1355, 1.0
    %v1410 = vsub.f32 %v1357, 1.0
    %v1411 = vsub.f32 %v1359, 1.0
    %v1412 = vsub.f32 %v1361, 1.0
    %v1413 = vsub.f32 %v1363, 1.0
    %v1414 = vsub.f32 %v1365, 1.0
    %v1415 = vsub.f32 %v1367, 1.0
    %v1416 = vsub.f32 %v1369, 1.0
    %v1417 = vsub.f32 %v1371, 1.0
    %v1418 = vsub.f32 %v1373, 1.0
    %v1419 = vsub.f32 %v1375, 1.0
    %v1420 = vsub.f32 %v1377, 1.0
    %v1421 = vsub.f32 %v1379, 1.0
    %v1422 = vsub.f32 %v1381, 1.0
    %v1423 = vsub.f32 %v1383, 1.0
    %v1424 = vsub.f32 %v1385, 1.0
    %v1425 = vsub.f32 %v1387, 1.0
    %v1426 = vsub.f32 %v1389, 1.0
    %v1427 = vsub.f32 %v1391, 1.0
    %v1428 = vsub.f32 %v1393, 1.0
    %v1429 = vsub.f32 %v1395, 1.0
    %v1430 = vsub.f32 %v1397, 1.0
    %v1431 = vsub.f32 %v1399, 1.0
    %v1432 = vsel %vm1304, %v1146, %v1400
    %v1433 = vsel %vm1305, %v1151, %v1401
    %v1434 = vsel %vm1306, %v1156, %v1402
    %v1435 = vsel %vm1307, %v1161, %v1403
    %v1436 = vsel %vm1308, %v1166, %v1404
    %v1437 = vsel %vm1309, %v1171, %v1405
    %v1438 = vsel %vm1310, %v1176, %v1406
    %v1439 = vsel %vm1311, %v1181, %v1407
    %v1440 = vsel %vm1312, %v1186, %v1408
    %v1441 = vsel %vm1313, %v1191, %v1409
    %v1442 = vsel %vm1314, %v1196, %v1410
    %v1443 = vsel %vm1315, %v1201, %v1411
    %v1444 = vsel %vm1316, %v1206, %v1412
    %v1445 = vsel %vm1317, %v1211, %v1413
    %v1446 = vsel %vm1318, %v1216, %v1414
    %v1447 = vsel %vm1319, %v1221, %v1415
    %v1448 = vsel %vm1320, %v1226, %v1416
    %v1449 = vsel %vm1321, %v1231, %v1417
    %v1450 = vsel %vm1322, %v1236, %v1418
    %v1451 = vsel %vm1323, %v1241, %v1419
    %v1452 = vsel %vm1324, %v1246, %v1420
    %v1453 = vsel %vm1325, %v1251, %v1421
    %v1454 = vsel %vm1326, %v1256, %v1422
    %v1455 = vsel %vm1327, %v1261, %v1423
    %v1456 = vsel %vm1328, %v1266, %v1424
    %v1457 = vsel %vm1329, %v1271, %v1425
    %v1458 = vsel %vm1330, %v1276, %v1426
    %v1459 = vsel %vm1331, %v1281, %v1427
    %v1460 = vsel %vm1332, %v1286, %v1428
    %v1461 = vsel %vm1333, %v1291, %v1429
    %v1462 = vsel %vm1334, %v1296, %v1430
    %v1463 = vsel %vm1335, %v1301, %v1431
    %v1464 = vadd.f32 %v1432, 1.0
    %v1465 = vadd.f32 %v1433, 1.0
    %v1466 = vadd.f32 %v1434, 1.0
    %v1467 = vadd.f32 %v1435, 1.0
    %v1468 = vadd.f32 %v1436, 1.0
    %v1469 = vadd.f32 %v1437, 1.0
    %v1470 = vadd.f32 %v1438, 1.0
    %v1471 = vadd.f32 %v1439, 1.0
    %v1472 = vadd.f32 %v1440, 1.0
    %v1473 = vadd.f32 %v1441, 1.0
    %v1474 = vadd.f32 %v1442, 1.0
    %v1475 = vadd.f32 %v1443, 1.0
    %v1476 = vadd.f32 %v1444, 1.0
    %v1477 = vadd.f32 %v1445, 1.0
    %v1478 = vadd.f32 %v1446, 1.0
    %v1479 = vadd.f32 %v1447, 1.0
    %v1480 = vadd.f32 %v1448, 1.0
    %v1481 = vadd.f32 %v1449, 1.0
    %v1482 = vadd.f32 %v1450, 1.0
    %v1483 = vadd.f32 %v1451, 1.0
    %v1484 = vadd.f32 %v1452, 1.0
    %v1485 = vadd.f32 %v1453, 1.0
    %v1486 = vadd.f32 %v1454, 1.0
    %v1487 = vadd.f32 %v1455, 1.0
    %v1488 = vadd.f32 %v1456, 1.0
    %v1489 = vadd.f32 %v1457, 1.0
    %v1490 = vadd.f32 %v1458, 1.0
    %v1491 = vadd.f32 %v1459, 1.0
    %v1492 = vadd.f32 %v1460, 1.0
    %v1493 = vadd.f32 %v1461, 1.0
    %v1494 = vadd.f32 %v1462, 1.0
    %v1495 = vadd.f32 %v1463, 1.0
    %v1496 = vld [vmem:[#allocation2 + $0x20] sm:$0xff]
    %v1497 = vld [vmem:[#allocation2 + $0x28] sm:$0xff]
    %v1498 = vmul.f32 %v1464, %v1496
    %v1499 = vmul.f32 %v1465, %v1497
    %v1500 = vmul.f32 %v1466, %v1496
    %v1501 = vmul.f32 %v1467, %v1497
    %v1502 = vmul.f32 %v1468, %v1496
    %v1503 = vmul.f32 %v1469, %v1497
    %v1504 = vmul.f32 %v1470, %v1496
    %v1505 = vmul.f32 %v1471, %v1497
    %v1506 = vmul.f32 %v1472, %v1496
    %v1507 = vmul.f32 %v1473, %v1497
    %v1508 = vmul.f32 %v1474, %v1496
    %v1509 = vmul.f32 %v1475, %v1497
    %v1510 = vmul.f32 %v1476, %v1496
    %v1511 = vmul.f32 %v1477, %v1497
    %v1512 = vmul.f32 %v1478, %v1496
    %v1513 = vmul.f32 %v1479, %v1497
    %v1514 = vmul.f32 %v1480, %v1496
    %v1515 = vmul.f32 %v1481, %v1497
    %v1516 = vmul.f32 %v1482, %v1496
    %v1517 = vmul.f32 %v1483, %v1497
    %v1518 = vmul.f32 %v1484, %v1496
    %v1519 = vmul.f32 %v1485, %v1497
    %v1520 = vmul.f32 %v1486, %v1496
    %v1521 = vmul.f32 %v1487, %v1497
    %v1522 = vmul.f32 %v1488, %v1496
    %v1523 = vmul.f32 %v1489, %v1497
    %v1524 = vmul.f32 %v1490, %v1496
    %v1525 = vmul.f32 %v1491, %v1497
    %v1526 = vmul.f32 %v1492, %v1496
    %v1527 = vmul.f32 %v1493, %v1497
    %v1528 = vmul.f32 %v1494, %v1496
    %v1529 = vmul.f32 %v1495, %v1497
    %vm1530 = vcmask 7168
    %v1531 = vsel %vm1530, %v1498, 0.0
    %v1532 = vsel %vm1530, %v1499, 0.0
    %v1533 = vadd.f32 %v1531, %v1532
    %v1534 = vrot.slane %v1533, 4
    %v1535 = vadd.f32 %v1533, %v1534
    %v1536 = vrot.slane %v1535, 2
    %v1537 = vadd.f32 %v1535, %v1536
    %v1538 = vrot.slane %v1537, 1
    %v1539 = vadd.f32 %v1537, %v1538
    %v1540 = vsel %vm1530, %v1500, 0.0
    %v1541 = vsel %vm1530, %v1501, 0.0
    %v1542 = vadd.f32 %v1540, %v1541
    %v1543 = vrot.slane %v1542, 4
    %v1544 = vadd.f32 %v1542, %v1543
    %v1545 = vrot.slane %v1544, 2
    %v1546 = vadd.f32 %v1544, %v1545
    %v1547 = vrot.slane %v1546, 1
    %v1548 = vadd.f32 %v1546, %v1547
    %v1549 = vsel %vm1530, %v1502, 0.0
    %v1550 = vsel %vm1530, %v1503, 0.0
    %v1551 = vadd.f32 %v1549, %v1550
    %v1552 = vrot.slane %v1551, 4
    %v1553 = vadd.f32 %v1551, %v1552
    %v1554 = vrot.slane %v1553, 2
    %v1555 = vadd.f32 %v1553, %v1554
    %v1556 = vrot.slane %v1555, 1
    %v1557 = vadd.f32 %v1555, %v1556
    %v1558 = vsel %vm1530, %v1504, 0.0
    %v1559 = vsel %vm1530, %v1505, 0.0
    %v1560 = vadd.f32 %v1558, %v1559
    %v1561 = vrot.slane %v1560, 4
    %v1562 = vadd.f32 %v1560, %v1561
    %v1563 = vrot.slane %v1562, 2
    %v1564 = vadd.f32 %v1562, %v1563
    %v1565 = vrot.slane %v1564, 1
    %v1566 = vadd.f32 %v1564, %v1565
    %v1567 = vsel %vm1530, %v1506, 0.0
    %v1568 = vsel %vm1530, %v1507, 0.0
    %v1569 = vadd.f32 %v1567, %v1568
    %v1570 = vrot.slane %v1569, 4
    %v1571 = vadd.f32 %v1569, %v1570
    %v1572 = vrot.slane %v1571, 2
    %v1573 = vadd.f32 %v1571, %v1572
    %v1574 = vrot.slane %v1573, 1
    %v1575 = vadd.f32 %v1573, %v1574
    %v1576 = vsel %vm1530, %v1508, 0.0
    %v1577 = vsel %vm1530, %v1509, 0.0
    %v1578 = vadd.f32 %v1576, %v1577
    %v1579 = vrot.slane %v1578, 4
    %v1580 = vadd.f32 %v1578, %v1579
    %v1581 = vrot.slane %v1580, 2
    %v1582 = vadd.f32 %v1580, %v1581
    %v1583 = vrot.slane %v1582, 1
    %v1584 = vadd.f32 %v1582, %v1583
    %v1585 = vsel %vm1530, %v1510, 0.0
    %v1586 = vsel %vm1530, %v1511, 0.0
    %v1587 = vadd.f32 %v1585, %v1586
    %v1588 = vrot.slane %v1587, 4
    %v1589 = vadd.f32 %v1587, %v1588
    %v1590 = vrot.slane %v1589, 2
    %v1591 = vadd.f32 %v1589, %v1590
    %v1592 = vrot.slane %v1591, 1
    %v1593 = vadd.f32 %v1591, %v1592
    %v1594 = vsel %vm1530, %v1512, 0.0
    %v1595 = vsel %vm1530, %v1513, 0.0
    %v1596 = vadd.f32 %v1594, %v1595
    %v1597 = vrot.slane %v1596, 4
    %v1598 = vadd.f32 %v1596, %v1597
    %v1599 = vrot.slane %v1598, 2
    %v1600 = vadd.f32 %v1598, %v1599
    %v1601 = vrot.slane %v1600, 1
    %v1602 = vadd.f32 %v1600, %v1601
    %v1603 = vsel %vm1530, %v1514, 0.0
    %v1604 = vsel %vm1530, %v1515, 0.0
    %v1605 = vadd.f32 %v1603, %v1604
    %v1606 = vrot.slane %v1605, 4
    %v1607 = vadd.f32 %v1605, %v1606
    %v1608 = vrot.slane %v1607, 2
    %v1609 = vadd.f32 %v1607, %v1608
    %v1610 = vrot.slane %v1609, 1
    %v1611 = vadd.f32 %v1609, %v1610
    %v1612 = vsel %vm1530, %v1516, 0.0
    %v1613 = vsel %vm1530, %v1517, 0.0
    %v1614 = vadd.f32 %v1612, %v1613
    %v1615 = vrot.slane %v1614, 4
    %v1616 = vadd.f32 %v1614, %v1615
    %v1617 = vrot.slane %v1616, 2
    %v1618 = vadd.f32 %v1616, %v1617
    %v1619 = vrot.slane %v1618, 1
    %v1620 = vadd.f32 %v1618, %v1619
    %v1621 = vsel %vm1530, %v1518, 0.0
    %v1622 = vsel %vm1530, %v1519, 0.0
    %v1623 = vadd.f32 %v1621, %v1622
    %v1624 = vrot.slane %v1623, 4
    %v1625 = vadd.f32 %v1623, %v1624
    %v1626 = vrot.slane %v1625, 2
    %v1627 = vadd.f32 %v1625, %v1626
    %v1628 = vrot.slane %v1627, 1
    %v1629 = vadd.f32 %v1627, %v1628
    %v1630 = vsel %vm1530, %v1520, 0.0
    %v1631 = vsel %vm1530, %v1521, 0.0
    %v1632 = vadd.f32 %v1630, %v1631
    %v1633 = vrot.slane %v1632, 4
    %v1634 = vadd.f32 %v1632, %v1633
    %v1635 = vrot.slane %v1634, 2
    %v1636 = vadd.f32 %v1634, %v1635
    %v1637 = vrot.slane %v1636, 1
    %v1638 = vadd.f32 %v1636, %v1637
    %v1639 = vsel %vm1530, %v1522, 0.0
    %v1640 = vsel %vm1530, %v1523, 0.0
    %v1641 = vadd.f32 %v1639, %v1640
    %v1642 = vrot.slane %v1641, 4
    %v1643 = vadd.f32 %v1641, %v1642
    %v1644 = vrot.slane %v1643, 2
    %v1645 = vadd.f32 %v1643, %v1644
    %v1646 = vrot.slane %v1645, 1
    %v1647 = vadd.f32 %v1645, %v1646
    %v1648 = vsel %vm1530, %v1524, 0.0
    %v1649 = vsel %vm1530, %v1525, 0.0
    %v1650 = vadd.f32 %v1648, %v1649
    %v1651 = vrot.slane %v1650, 4
    %v1652 = vadd.f32 %v1650, %v1651
    %v1653 = vrot.slane %v1652, 2
    %v1654 = vadd.f32 %v1652, %v1653
    %v1655 = vrot.slane %v1654, 1
    %v1656 = vadd.f32 %v1654, %v1655
    %v1657 = vsel %vm1530, %v1526, 0.0
    %v1658 = vsel %vm1530, %v1527, 0.0
    %v1659 = vadd.f32 %v1657, %v1658
    %v1660 = vrot.slane %v1659, 4
    %v1661 = vadd.f32 %v1659, %v1660
    %v1662 = vrot.slane %v1661, 2
    %v1663 = vadd.f32 %v1661, %v1662
    %v1664 = vrot.slane %v1663, 1
    %v1665 = vadd.f32 %v1663, %v1664
    %v1666 = vsel %vm1530, %v1528, 0.0
    %v1667 = vsel %vm1530, %v1529, 0.0
    %v1668 = vadd.f32 %v1666, %v1667
    %v1669 = vrot.slane %v1668, 4
    %v1670 = vadd.f32 %v1668, %v1669
    %v1671 = vrot.slane %v1670, 2
    %v1672 = vadd.f32 %v1670, %v1671
    %v1673 = vrot.slane %v1672, 1
    %v1674 = vadd.f32 %v1672, %v1673
    %v1675 = vrot.slane %v28, 1
    %v1676 = vrot.slane %v28, 2
    %v1677 = vrot.slane %v28, 3
    %v1678 = vrot.slane %v28, 4
    %v1679 = vrot.slane %v28, 5
    %v1680 = vrot.slane %v28, 6
    %v1681 = vrot.slane %v28, 7
    %v1682 = vrot.slane %v29, 1
    %v1683 = vrot.slane %v29, 2
    %v1684 = vrot.slane %v29, 3
    %v1685 = vrot.slane %v29, 4
    %v1686 = vrot.slane %v29, 5
    %v1687 = vrot.slane %v29, 6
    %v1688 = vrot.slane %v29, 7
    %v1705 = vmul.f32 %v1539, %v28
    %v1706 = vmul.f32 %v1548, %v1675
    %v1707 = vmul.f32 %v1557, %v1676
    %v1708 = vmul.f32 %v1566, %v1677
    %v1709 = vmul.f32 %v1575, %v1678
    %v1710 = vmul.f32 %v1584, %v1679
    %v1711 = vmul.f32 %v1593, %v1680
    %v1712 = vmul.f32 %v1602, %v1681
    %v1713 = vmul.f32 %v1611, %v29
    %v1714 = vmul.f32 %v1620, %v1682
    %v1715 = vmul.f32 %v1629, %v1683
    %v1716 = vmul.f32 %v1638, %v1684
    %v1717 = vmul.f32 %v1647, %v1685
    %v1718 = vmul.f32 %v1656, %v1686
    %v1719 = vmul.f32 %v1665, %v1687
    %v1720 = vmul.f32 %v1674, %v1688
    %v1721 = vld [vmem:[#allocation2 + $0x50] sm:$0xff]
    %v1722 = vld [vmem:[#allocation2 + $0x58] sm:$0xff]
    %v1723 = vld [vmem:[#allocation2 + $0x60] sm:$0xff]
    %v1724 = vld [vmem:[#allocation2 + $0x68] sm:$0xff]
    %v1725 = vld [vmem:[#allocation2 + $0x2] sm:$0x1]
    %v1726 = vlaneseq
    %v1727 = vshrl.u32 %v1726, 7
    %v1728 = vsub.s32 0, %v1727
    %v1729 = vrot.slane %v1725, %v1728
    %1732 = vrot.lane.b32.xlu0 %v124, 96
    %v1733 = vpop.permute.xlu0 %1732
    %1734 = vrot.lane.b32.xlu0 %v125, 96
    %v1735 = vpop.permute.xlu0 %1734
    %v1736 = vsel %vm620, %v1733, 0
    %v1738 = vsel %vm620, %v1735, 0
    %1740 = vmatprep.subr.mxu0 0.0
    %1741 = vmatpush1.msra.mxu0 0.0
    %1742 = vmatprep.subr.mxu0 0.0
    %1743 = vmatpush1.msra.mxu0 0.0
    %1744 = vmatprep.subr.mxu0 0.0
    %1745 = vmatpush1.msra.mxu0 0.0
    %1746 = vmatprep.subr.mxu0 0.0
    %1747 = vmatpush1.msra.mxu0 0.0
    %1748 = vmatprep.subr.mxu0 0.0
    %1749 = vmatpush1.msra.mxu0 0.0
    %1750 = vmatprep.subr.mxu0 0.0
    %1751 = vmatpush1.msra.mxu0 0.0
    %1752 = vmatprep.subr.mxu0 0.0
    %1753 = vmatpush1.msra.mxu0 0.0
    %1754 = vmatprep.subr.mxu0 0.0
    %1755 = vmatpush1.msra.mxu0 0.0
    %1756 = vmatprep.subr.mxu0 0.0
    %1757 = vmatpush1.msra.mxu0 0.0
    %1758 = vmatprep.subr.mxu0 0.0
    %1759 = vmatpush1.msra.mxu0 0.0
    %1760 = vmatprep.subr.mxu0 0.0
    %1761 = vmatpush1.msra.mxu0 0.0
    %1762 = vmatprep.subr.mxu0 0.0
    %1763 = vmatpush1.msra.mxu0 0.0
    %1764 = vmatprep.subr.mxu0 0.0
    %1765 = vmatpush1.msra.mxu0 %v1724
    %1766 = vmatprep.subr.mxu0 0.0
    %1767 = vmatpush1.msra.mxu0 %v1723
    %1768 = vmatprep.subr.mxu0 0.0
    %1769 = vmatpush1.msra.mxu0 %v1722
    %1770 = vmatprep.subr.mxu0 0.0
    %1771 = vmatpush1.msra.mxu0 %v1721
    %1772 = vmatprep.subr.mxu0 0.0
    %1773 = vmatpush2.msra.mxu0 0.0
    %1774 = vmatprep.subr.mxu0 0.0
    %1775 = vmatpush2.msra.mxu0 0.0
    %1776 = vmatprep.subr.mxu0 0.0
    %1777 = vmatpush2.msra.mxu0 0.0
    %1778 = vmatprep.subr.mxu0 0.0
    %1779 = vmatpush2.msra.mxu0 0.0
    %1780 = vmatprep.subr.mxu0 0.0
    %1781 = vmatpush2.msra.mxu0 0.0
    %1782 = vmatprep.subr.mxu0 0.0
    %1783 = vmatpush2.msra.mxu0 0.0
    %1784 = vmatprep.subr.mxu0 0.0
    %1785 = vmatpush2.msra.mxu0 0.0
    %1786 = vmatprep.subr.mxu0 0.0
    %1787 = vmatpush2.msra.mxu0 0.0
    %1788 = vmatprep.subr.mxu0 0.0
    %1789 = vmatpush2.msra.mxu0 0.0
    %1790 = vmatprep.subr.mxu0 0.0
    %1791 = vmatpush2.msra.mxu0 0.0
    %1792 = vmatprep.subr.mxu0 0.0
    %1793 = vmatpush2.msra.mxu0 0.0
    %1794 = vmatprep.subr.mxu0 0.0
    %1795 = vmatpush2.msra.mxu0 0.0
    %1796 = vmatprep.subr.mxu0 0.0
    %1797 = vmatpush2.msra.mxu0 0.0
    %1798 = vmatprep.subr.mxu0 0.0
    %1799 = vmatpush2.msra.mxu0 0.0
    %1800 = vmatprep.subr.mxu0 0.0
    %1801 = vmatpush2.msra.mxu0 0.0
    %1802 = vmatprep.subr.mxu0 0.0
    %1803 = vmatpush2.msra.mxu0 0.0
    %1804 = vmatprep.mubr.f32.mxu0 0.0
    %1805 = vmatmul.mubr.f32.gmra.mxu0 %v1736
    %v1806 = vpop.f32.mrf.mxu0
    %v1807 = vadd.f32 %v1729, %v1806
    %v1808 = vpop.f32.mrf.mxu0
    %1809 = vmatprep.mubr.f32.mxu0 0.0
    %1810 = vmatmul.mubr.f32.gmra.mxu0 %v1738
    %v1811 = vpop.f32.mrf.mxu0
    %v1812 = vadd.f32 %v1729, %v1811
    %v1813 = vpop.f32.mrf.mxu0
    %1814 = vdwg.mxu0
    %v1815 = vmax.f32 %v1807, 0.0
    %v1816 = vmax.f32 %v1812, 0.0
    %v1817 = vld [vmem:[#allocation2 + $0x90] sm:$0xff]
    %v1818 = vld [vmem:[#allocation2 + $0x98] sm:$0xff]
    %v1819 = vld [vmem:[#allocation2 + $0xa0] sm:$0xff]
    %v1820 = vld [vmem:[#allocation2 + $0xa8] sm:$0xff]
    %v1821 = vld [vmem:[#allocation2 + $0x4] sm:$0x1]
    %v1822 = vlaneseq
    %v1823 = vshrl.u32 %v1822, 7
    %v1824 = vsub.s32 0, %v1823
    %v1825 = vrot.slane %v1821, %v1824
    %v1827 = vsel %vm620, %v1815, 0
    %v1830 = vsel %vm620, %v1816, 0
    %1832 = vmatprep.subr.mxu0 0.0
    %1833 = vmatpush1.msra.mxu0 0.0
    %1834 = vmatprep.subr.mxu0 0.0
    %1835 = vmatpush1.msra.mxu0 0.0
    %1836 = vmatprep.subr.mxu0 0.0
    %1837 = vmatpush1.msra.mxu0 0.0
    %1838 = vmatprep.subr.mxu0 0.0
    %1839 = vmatpush1.msra.mxu0 0.0
    %1840 = vmatprep.subr.mxu0 0.0
    %1841 = vmatpush1.msra.mxu0 0.0
    %1842 = vmatprep.subr.mxu0 0.0
    %1843 = vmatpush1.msra.mxu0 0.0
    %1844 = vmatprep.subr.mxu0 0.0
    %1845 = vmatpush1.msra.mxu0 0.0
    %1846 = vmatprep.subr.mxu0 0.0
    %1847 = vmatpush1.msra.mxu0 0.0
    %1848 = vmatprep.subr.mxu0 0.0
    %1849 = vmatpush1.msra.mxu0 0.0
    %1850 = vmatprep.subr.mxu0 0.0
    %1851 = vmatpush1.msra.mxu0 0.0
    %1852 = vmatprep.subr.mxu0 0.0
    %1853 = vmatpush1.msra.mxu0 0.0
    %1854 = vmatprep.subr.mxu0 0.0
    %1855 = vmatpush1.msra.mxu0 0.0
    %1856 = vmatprep.subr.mxu0 0.0
    %1857 = vmatpush1.msra.mxu0 %v1820
    %1858 = vmatprep.subr.mxu0 0.0
    %1859 = vmatpush1.msra.mxu0 %v1819
    %1860 = vmatprep.subr.mxu0 0.0
    %1861 = vmatpush1.msra.mxu0 %v1818
    %1862 = vmatprep.subr.mxu0 0.0
    %1863 = vmatpush1.msra.mxu0 %v1817
    %1864 = vmatprep.subr.mxu0 0.0
    %1865 = vmatpush2.msra.mxu0 0.0
    %1866 = vmatprep.subr.mxu0 0.0
    %1867 = vmatpush2.msra.mxu0 0.0
    %1868 = vmatprep.subr.mxu0 0.0
    %1869 = vmatpush2.msra.mxu0 0.0
    %1870 = vmatprep.subr.mxu0 0.0
    %1871 = vmatpush2.msra.mxu0 0.0
    %1872 = vmatprep.subr.mxu0 0.0
    %1873 = vmatpush2.msra.mxu0 0.0
    %1874 = vmatprep.subr.mxu0 0.0
    %1875 = vmatpush2.msra.mxu0 0.0
    %1876 = vmatprep.subr.mxu0 0.0
    %1877 = vmatpush2.msra.mxu0 0.0
    %1878 = vmatprep.subr.mxu0 0.0
    %1879 = vmatpush2.msra.mxu0 0.0
    %1880 = vmatprep.subr.mxu0 0.0
    %1881 = vmatpush2.msra.mxu0 0.0
    %1882 = vmatprep.subr.mxu0 0.0
    %1883 = vmatpush2.msra.mxu0 0.0
    %1884 = vmatprep.subr.mxu0 0.0
    %1885 = vmatpush2.msra.mxu0 0.0
    %1886 = vmatprep.subr.mxu0 0.0
    %1887 = vmatpush2.msra.mxu0 0.0
    %1888 = vmatprep.subr.mxu0 0.0
    %1889 = vmatpush2.msra.mxu0 0.0
    %1890 = vmatprep.subr.mxu0 0.0
    %1891 = vmatpush2.msra.mxu0 0.0
    %1892 = vmatprep.subr.mxu0 0.0
    %1893 = vmatpush2.msra.mxu0 0.0
    %1894 = vmatprep.subr.mxu0 0.0
    %1895 = vmatpush2.msra.mxu0 0.0
    %1896 = vmatprep.mubr.f32.mxu0 0.0
    %1897 = vmatmul.mubr.f32.gmra.mxu0 %v1827
    %v1898 = vpop.f32.mrf.mxu0
    %v1899 = vadd.f32 %v1825, %v1898
    %v1900 = vpop.f32.mrf.mxu0
    %1901 = vmatprep.mubr.f32.mxu0 0.0
    %1902 = vmatmul.mubr.f32.gmra.mxu0 %v1830
    %v1903 = vpop.f32.mrf.mxu0
    %v1904 = vadd.f32 %v1825, %v1903
    %v1905 = vpop.f32.mrf.mxu0
    %1906 = vdwg.mxu0
    %v1907 = vmul.f32 %v1899, 1.442695
    %v1908 = vpow.pop %v1907
    %v1909 = vmul.f32 %v1904, 1.442695
    %v1910 = vpow.pop %v1909
    %v1927 = vrot.slane %v1706, 7
    %vm1928 = vcmask 1041409
    %v1929 = vsel %vm1928, %v1927, %v1705
    %v1930 = vrot.slane %v1707, 6
    %vm1931 = vcmask 1042434
    %v1932 = vsel %vm1931, %v1930, %v1929
    %v1933 = vrot.slane %v1708, 5
    %vm1934 = vcmask 1043459
    %v1935 = vsel %vm1934, %v1933, %v1932
    %v1936 = vrot.slane %v1709, 4
    %vm1937 = vcmask 1044484
    %v1938 = vsel %vm1937, %v1936, %v1935
    %v1939 = vrot.slane %v1710, 3
    %vm1940 = vcmask 1045509
    %v1941 = vsel %vm1940, %v1939, %v1938
    %v1942 = vrot.slane %v1711, 2
    %vm1943 = vcmask 1046534
    %v1944 = vsel %vm1943, %v1942, %v1941
    %v1945 = vrot.slane %v1712, 1
    %vm1946 = vcmask 1047559
    %v1947 = vsel %vm1946, %v1945, %v1944
    %v1948 = vrot.slane %v1714, 7
    %v1949 = vsel %vm1928, %v1948, %v1713
    %v1950 = vrot.slane %v1715, 6
    %v1951 = vsel %vm1931, %v1950, %v1949
    %v1952 = vrot.slane %v1716, 5
    %v1953 = vsel %vm1934, %v1952, %v1951
    %v1954 = vrot.slane %v1717, 4
    %v1955 = vsel %vm1937, %v1954, %v1953
    %v1956 = vrot.slane %v1718, 3
    %v1957 = vsel %vm1940, %v1956, %v1955
    %v1958 = vrot.slane %v1719, 2
    %v1959 = vsel %vm1943, %v1958, %v1957
    %v1960 = vrot.slane %v1720, 1
    %v1961 = vsel %vm1946, %v1960, %v1959
    %1962 = vrot.lane.b32.xlu0 %v1947, 1
    %v1963 = vpop.permute.xlu0 %1962
    %1964 = vrot.lane.b32.xlu0 %v1961, 1
    %v1965 = vpop.permute.xlu0 %1964
    %v1968 = vmul.f32 %v1908, %v1963
    %v1969 = vmul.f32 %v1910, %v1965
    %1972 = vrot.lane.b32.xlu0 %v1899, 1
    %v1973 = vpop.permute.xlu0 %1972
    %1974 = vrot.lane.b32.xlu0 %v1904, 1
    %v1975 = vpop.permute.xlu0 %1974
    %v1978 = vadd.f32 %v1968, %v1973
    %v1979 = vadd.f32 %v1969, %v1975
    %1982 = vrot.lane.b32.xlu0 %v1978, 127
    %v1983 = vpop.permute.xlu0 %1982
    %1984 = vrot.lane.b32.xlu0 %v1979, 127
    %v1985 = vpop.permute.xlu0 %1984
    %1988 = vst.msk [vmem:[%s3] sm:$0xff] %vm1530, %v1983
    %1989 = vst.msk [vmem:[%s3 + $0x8] sm:$0xff] %vm1530, %v1985
    // Predicated region
    $region18: #{tpu_custom_call.1} parent=1 // pred_check
      _
    $region19: #{tpu_custom_call.1} parent=1 // pred_check_branch
      %1991 = sbr.rel (0) target = $region21
    $region20: #{tpu_custom_call.1} parent=1 // pred_region
      _
    $region21: #{tpu_custom_call.1} parent=1 // pred_fallthru
      _
    // Predicated region
    $region22: #{tpu_custom_call.1} parent=1 // pred_check
      _
    $region23: #{tpu_custom_call.1} parent=1 // pred_check_branch
      %1993 = sbr.rel (0) target = $region25
    $region24: #{tpu_custom_call.1} parent=1 // pred_region
      _
    $region25: #{tpu_custom_call.1} parent=1 // pred_fallthru
      _
    %1994 = vsyncpa [#allocation3], 1

</llo_original>
